<compile_context>
chip_gen: v6e
topology: v6e:2x2x1
jax: 0.10.0
libtpu: 0.0.40
codegen_flags: <defaults>
</compile_context>

<pallas_src>
import math
import functools

import jax
import jax.numpy as jnp
from jax.experimental import pallas as pl
from jax.experimental.pallas import tpu as pltpu


# --------------------------------------------------------------------------- #
# Device-aware helpers
# --------------------------------------------------------------------------- #
def _device_kind() -> str:
    try:
        return jax.devices()[0].device_kind.lower()
    except Exception:
        return ""


def _row_tile_target() -> int:
    """MXU-native row count: 128 on v5 (4x128^2 MXU), 256 on v6e / v7x."""
    kind = _device_kind()
    if "v5" in kind:          # "TPU v5 lite", "TPU v5e", "TPU v5p", "v5litepod"
        return 128
    return 256


def _physical_vmem_bytes() -> int:
    """Physical VMEM per TensorCore: 128 MiB on v4/v5/v6, 64 MiB on v7x/unknown."""
    kind = _device_kind()
    if any(tag in kind for tag in ("v4", "v5", "v6")):
        return 128 << 20
    return 64 << 20


def _vmem_limit(*live_bytes) -> int:
    """Generation-aware scoped-VMEM budget: double-buffered pipeline blocks plus
    headroom, clamped to ~96 MiB on 128-MiB chips (v5e/v6e) and ~52 MiB on 64-MiB
    chips (v7x) so compiler-internal scratch always has room."""
    phys = _physical_vmem_bytes()
    cap = (96 << 20) if phys >= (128 << 20) else (52 << 20)
    need = 2 * sum(int(b) for b in live_bytes) + (8 << 20)
    return int(min(max(need, 32 << 20), cap))


def _pick_tile(n: int, target: int) -> int:
    """Largest tile <= target dividing n; prefer multiples of 16 (bf16 sublane
    packing), then multiples of 8 (f32 sublanes)."""
    if n <= target:
        return n
    for step in (16, 8):
        start = target - (target % step)
        for t in range(start, 0, -step):
            if n % t == 0:
                return t
    # TODO(synk): pad S to a multiple of 8 and mask padded KV rows instead of
    # falling back to a single full-extent block (latent VMEM cliff for odd S).
    return n


# --------------------------------------------------------------------------- #
# Kernel A: fused Q / K input projections, writing head-major tiles directly.
# --------------------------------------------------------------------------- #
def _qk_proj_kernel(q_ref, k_ref, wq_ref, bq_ref, wk_ref, bk_ref,
                    qh_ref, kh_ref, *, scale, num_heads, d_k):
    # bf16 operands, f32 accumulation; weights arrive pre-transposed (in, out).
    q = q_ref[...].astype(jnp.bfloat16)                                   # (tm, D)
    k = k_ref[...].astype(jnp.bfloat16)                                   # (tm, D)
    qp = (jnp.dot(q, wq_ref[...], preferred_element_type=jnp.float32)
          + bq_ref[...]) * scale       # fold 1/sqrt(d_k) into the Q projection
    kp = jnp.dot(k, wk_ref[...], preferred_element_type=jnp.float32) + bk_ref[...]
    # Head-major write via static lane slices of the row tile: this replaces the
    # old XLA (B,S,H,d_k)->(B,H,S,d_k) transpose, which was a full HBM pass.
    for h in range(num_heads):
        sl = slice(h * d_k, (h + 1) * d_k)
        qh_ref[h] = qp[:, sl].astype(jnp.bfloat16)                        # (tm, d_k)
        kh_ref[h] = kp[:, sl].astype(jnp.bfloat16)


# --------------------------------------------------------------------------- #
# Kernel B: head-batched online-softmax (flash) attention with the W_o output
# projection fused into the finalize step (lane-dense (tq, D) stores).
# --------------------------------------------------------------------------- #
def _flash_attn_fused_kernel(qh_ref, kh_ref, wo_ref, bo_ref, o_ref,
                             m_ref, l_ref, acc_ref):
    ki = pl.program_id(2)

    @pl.when(ki == 0)
    def _init():
        m_ref[...] = jnp.full(m_ref.shape, -jnp.inf, m_ref.dtype)
        l_ref[...] = jnp.zeros(l_ref.shape, l_ref.dtype)
        acc_ref[...] = jnp.zeros(acc_ref.shape, acc_ref.dtype)

    qh = qh_ref[...]            # (H, tq, d_k) bf16, already carries 1/sqrt(d_k)
    kh = kh_ref[...]            # (H, tk, d_k) bf16
    vh = kh                     # reference-module quirk: V == W_k projection of K

    # Scores for all heads at once (MXU, f32 accumulate).
    s = jnp.einsum("hqd,hkd->hqk", qh, kh,
                   preferred_element_type=jnp.float32)                    # (H,tq,tk)
    # TODO(synk): masked_fill branch not exercised (mask=None); a block mask on
    # `s` would go here (also needed if S is ever padded to a tile multiple).

    m_prev = m_ref[...]                                                   # (H,tq,1)
    m_new = jnp.maximum(m_prev, jnp.max(s, axis=-1, keepdims=True))
    alpha = jnp.exp(m_prev - m_new)
    p = jnp.exp(s - m_new)                                                # (H,tq,tk)

    l_ref[...] = alpha * l_ref[...] + jnp.sum(p, axis=-1, keepdims=True)
    acc_ref[...] = alpha * acc_ref[...] + jnp.einsum(
        "hqk,hkd->hqd", p.astype(jnp.bfloat16), vh,
        preferred_element_type=jnp.float32)                               # (H,tq,d_k)
    m_ref[...] = m_new

    @pl.when(ki == pl.num_programs(2) - 1)
    def _finalize():
        inv_l = pl.reciprocal(l_ref[...], approx=True)   # EUP slot, effectively free
        o = (acc_ref[...] * inv_l).astype(jnp.bfloat16)                   # (H,tq,d_k)
        num_heads = o.shape[0]
        # Fused output projection: concat_h(O_h) @ Wo^T + bo  ==  sum_h O_h @ Wo_h.
        # Per-head 2D MXU dots keep the accumulator head-major (no in-kernel
        # transpose/reshape) while the HBM store stays a lane-dense (tq, D) block.
        out = jnp.dot(o[0], wo_ref[0], preferred_element_type=jnp.float32)
        for h in range(1, num_heads):
            out = out + jnp.dot(o[h], wo_ref[h],
                                preferred_element_type=jnp.float32)
        o_ref[...] = (out + bo_ref[...]).astype(o_ref.dtype)              # (tq, D)


# --------------------------------------------------------------------------- #
# Wrapper
# --------------------------------------------------------------------------- #
@functools.partial(jax.jit, static_argnames=("num_heads",))
def multi_head_attention(Q, K, V, params, *, num_heads: int):
    """Pallas MHA forward matching the reference module.  Q, K, V: (B, S, D) f32.
    V never reaches the compute path (reference-module quirk: V = W_k(K))."""
    del V
    B, S, D = Q.shape
    assert D % num_heads == 0
    d_k = D // num_heads
    scale = 1.0 / math.sqrt(d_k)

    wq, bq = params["W_q"]
    wk, bk = params["W_k"]
    wo, bo = params["W_o"]
    # Host-side, one-time: PyTorch (out, in) -> (in, out) layout and bf16 weights.
    # W_o is additionally pre-split per head: (D, D) -> (H, d_k, D).
    wq_t = wq.T.astype(jnp.bfloat16)
    wk_t = wk.T.astype(jnp.bfloat16)
    wo_hd = wo.T.astype(jnp.bfloat16).reshape(num_heads, d_k, D)
    bq = bq.reshape(1, D).astype(jnp.float32)
    bk = bk.reshape(1, D).astype(jnp.float32)
    bo = bo.reshape(1, D).astype(jnp.float32)

    target_rows = _row_tile_target()
    tm = _pick_tile(S, target_rows)   # projection row tile (per batch)
    tq = _pick_tile(S, target_rows)   # attention query tile
    tk = _pick_tile(S, target_rows)   # attention key/value tile

    # ---------------- Kernel A: Q / K projections, head-major outputs ----------
    w_spec = pl.BlockSpec((D, D), lambda b, i: (0, 0))
    b_spec = pl.BlockSpec((1, D), lambda b, i: (0, 0))
    row_in_spec = pl.BlockSpec((None, tm, D), lambda b, i: (b, i, 0))
    head_out_spec = pl.BlockSpec((None, num_heads, tm, d_k),
                                 lambda b, i: (b, 0, i, 0))
    # TODO(synk): for very large D on v7x, tile the (D, D) weights along their
    # output dim (or single-buffer them) so double-buffered weights never dominate
    # the 64 MiB VMEM; not needed at the shapes exercised here.

    qh, kh = pl.pallas_call(
        functools.partial(_qk_proj_kernel, scale=scale,
                          num_heads=num_heads, d_k=d_k),
        out_shape=(jax.ShapeDtypeStruct((B, num_heads, S, d_k), jnp.bfloat16),
                   jax.ShapeDtypeStruct((B, num_heads, S, d_k), jnp.bfloat16)),
        grid_spec=pltpu.PrefetchScalarGridSpec(
            num_scalar_prefetch=0,
            grid=(B, S // tm),
            in_specs=[row_in_spec, row_in_spec, w_spec, b_spec, w_spec, b_spec],
            out_specs=[head_out_spec, head_out_spec],
        ),
        compiler_params=pltpu.CompilerParams(
            dimension_semantics=("parallel", "parallel"),
            vmem_limit_bytes=_vmem_limit(2 * tm * D * 4, 2 * D * D * 2,
                                         2 * D * 4, 2 * tm * D * 2),
        ),
        cost_estimate=pl.CostEstimate(
            flops=4 * B * S * D * D, transcendentals=0,
            bytes_accessed=2 * B * S * D * 4 + 2 * D * D * 2 + 2 * B * S * D * 2),
    )(Q, K, wq_t, bq, wk_t, bk)

    # ---------------- Kernel B: flash attention + fused output projection ------
    n_q = S // tq
    q_spec = pl.BlockSpec((None, num_heads, tq, d_k),
                          lambda b, qi, ki: (b, 0, qi, 0))
    k_spec = pl.BlockSpec((None, num_heads, tk, d_k),
                          lambda b, qi, ki: (b, 0, ki, 0))
    wo_spec = pl.BlockSpec((num_heads, d_k, D), lambda b, qi, ki: (0, 0, 0))
    bo_spec = pl.BlockSpec((1, D), lambda b, qi, ki: (0, 0))
    o_spec = pl.BlockSpec((None, tq, D), lambda b, qi, ki: (b, qi, 0))

    # Megacore (v7x): B and q_tiles are both "parallel" axes, so the two
    # TensorCores shard over them; the KV (reduction) axis stays innermost.
    out = pl.pallas_call(
        _flash_attn_fused_kernel,
        out_shape=jax.ShapeDtypeStruct((B, S, D), Q.dtype),
        grid_spec=pltpu.PrefetchScalarGridSpec(
            num_scalar_prefetch=0,
            grid=(B, n_q, S // tk),
            in_specs=[q_spec, k_spec, wo_spec, bo_spec],
            out_specs=o_spec,
            scratch_shapes=[
                pltpu.VMEM((num_heads, tq, 1), jnp.float32),    # running max
                pltpu.VMEM((num_heads, tq, 1), jnp.float32),    # running denom
                pltpu.VMEM((num_heads, tq, d_k), jnp.float32),  # output accumulator
            ],
        ),
        compiler_params=pltpu.CompilerParams(
            dimension_semantics=("parallel", "parallel", "arbitrary"),
            vmem_limit_bytes=_vmem_limit(
                num_heads * tq * d_k * 2,            # q tile
                num_heads * tk * d_k * 2,            # k tile
                D * D * 2 + D * 4,                   # W_o + b_o
                tq * D * 4,                          # output tile
                num_heads * tq * (2 + d_k) * 4,      # m/l/acc scratch
                2 * num_heads * tq * tk * 4),        # score / prob intermediates
        ),
        cost_estimate=pl.CostEstimate(
            flops=4 * B * S * S * D + 2 * B * S * D * D,
            transcendentals=B * num_heads * S * S,
            bytes_accessed=(B * S * D * 2              # Q stream
                            + n_q * B * S * D * 2      # K stream, re-read per q tile
                            + D * D * 2 + D * 4        # W_o, b_o
                            + B * S * D * 4)),         # output
    )(qh, kh, wo_hd, bo)

    return out


# --------------------------------------------------------------------------- #
# Plain-JAX references (for the in-script sanity check)
# --------------------------------------------------------------------------- #
def _reference_f32(Q, K, params, num_heads):
    """f32 reference of the module's (intended) forward, V = W_k(K) quirk included."""
    B, S, D = Q.shape
    d_k = D // num_heads
    wq, bq = params["W_q"]; wk, bk = params["W_k"]; wo, bo = params["W_o"]
    Qp = Q @ wq.T + bq
    Kp = K @ wk.T + bk
    Vp = Kp
    split = lambda x: x.reshape(B, S, num_heads, d_k).transpose(0, 2, 1, 3)
    Qh, Kh, Vh = split(Qp), split(Kp), split(Vp)
    s = jnp.einsum("bhqd,bhkd->bhqk", Qh, Kh) / math.sqrt(d_k)
    p = jax.nn.softmax(s, axis=-1)
    o = jnp.einsum("bhqk,bhkd->bhqd", p, Vh)
    return o.transpose(0, 2, 1, 3).reshape(B, S, D) @ wo.T + bo


def _reference_bf16_matched(Q, K, params, num_heads):
    """Mirrors the kernels' bf16 cast points (f32 accumulation) for a tight check."""
    B, S, D = Q.shape
    d_k = D // num_heads
    scale = 1.0 / math.sqrt(d_k)
    wq, bq = params["W_q"]; wk, bk = params["W_k"]; wo, bo = params["W_o"]
    f32 = lambda x: x.astype(jnp.float32)
    wq_t = f32(wq.T.astype(jnp.bfloat16))
    wk_t = f32(wk.T.astype(jnp.bfloat16))
    wo_t = f32(wo.T.astype(jnp.bfloat16))
    qb = f32(Q.astype(jnp.bfloat16)).reshape(B * S, D)
    kb = f32(K.astype(jnp.bfloat16)).reshape(B * S, D)
    Qp = f32(((qb @ wq_t + bq) * scale).astype(jnp.bfloat16)).reshape(B, S, num_heads, d_k)
    Kp = f32((kb @ wk_t + bk).astype(jnp.bfloat16)).reshape(B, S, num_heads, d_k)
    s = jnp.einsum("bqhd,bkhd->bhqk", Qp, Kp)
    p = f32(jax.nn.softmax(s, axis=-1).astype(jnp.bfloat16))
    o = jnp.einsum("bhqk,bkhd->bqhd", p, Kp)            # V = Kp (reference quirk)
    attn = f32(o.reshape(B, S, D).astype(jnp.bfloat16))
    return attn @ wo_t + bo


def init_params(key, d_model):
    """Deterministic PyTorch-Linear-style init: U(-1/sqrt(d), 1/sqrt(d))."""
    bound = 1.0 / math.sqrt(d_model)
    params = {}
    for name in ("W_q", "W_k", "W_v", "W_o"):   # W_v allocated but unused (quirk)
        key, kw, kb = jax.random.split(key, 3)
        w = jax.random.uniform(kw, (d_model, d_model), jnp.float32, -bound, bound)
        b = jax.random.uniform(kb, (d_model,), jnp.float32, -bound, bound)
        params[name] = (w, b)
    return params


if __name__ == "__main__":
    B, S, D, H = 2, 8, 32, 4   # batch, seq, d_model, num_heads (d_k = 8)

    key = jax.random.PRNGKey(0)
    key_q, key_k, key_v, key_p = jax.random.split(key, 4)
    Q = jax.random.normal(key_q, (B, S, D), jnp.float32)
    K = jax.random.normal(key_k, (B, S, D), jnp.float32)
    V = jax.random.normal(key_v, (B, S, D), jnp.float32)
    params = init_params(key_p, D)

    out = multi_head_attention(Q, K, V, params, num_heads=H)
    out = jax.block_until_ready(out)
    assert out.shape == (B, S, D)

    ref_matched = _reference_bf16_matched(Q, K, params, H)
    ref_f32 = _reference_f32(Q, K, params, H)
    err_m = float(jnp.max(jnp.abs(out - ref_matched)))
    err_f = float(jnp.max(jnp.abs(out - ref_f32)))
    assert jnp.allclose(out, ref_matched, atol=2e-2, rtol=2e-2), (
        "mismatch vs bf16-matched reference, max |diff| = %e" % err_m)
    assert jnp.allclose(out, ref_f32, atol=1e-1, rtol=1e-1), (
        "mismatch vs f32 reference, max |diff| = %e" % err_f)

    print("KERNEL_OK")
</pallas_src>

<mosaic_0001>
module attributes {stable_mosaic.version = 11 : i64} {
  func.func @_qk_proj_kernel(%arg0: i32, %arg1: i32, %arg2: memref<1x8x32xf32, #tpu.memory_space<vmem>>, %arg3: memref<1x8x32xf32, #tpu.memory_space<vmem>>, %arg4: memref<32x32xbf16, #tpu.memory_space<vmem>>, %arg5: memref<1x32xf32, #tpu.memory_space<vmem>>, %arg6: memref<32x32xbf16, #tpu.memory_space<vmem>>, %arg7: memref<1x32xf32, #tpu.memory_space<vmem>>, %arg8: memref<1x4x8x8xbf16, #tpu.memory_space<vmem>>, %arg9: memref<1x4x8x8xbf16, #tpu.memory_space<vmem>>) attributes {dimension_semantics = [#tpu.dimension_semantics<parallel>, #tpu.dimension_semantics<parallel>], iteration_bounds = array<i64: 2, 1>, scalar_prefetch = 0 : i64, scratch_operands = 0 : i64, tpu.core_type = #tpu.core_type<tc>, window_params = [{transform_indices = @transform_0, window_bounds = array<i64: 1, 8, 32>}, {transform_indices = @transform_1, window_bounds = array<i64: 1, 8, 32>}, {pipeline_mode = #tpu.pipeline_mode<synchronous>, transform_indices = @transform_2, window_bounds = array<i64: 32, 32>}, {pipeline_mode = #tpu.pipeline_mode<synchronous>, transform_indices = @transform_3, window_bounds = array<i64: 1, 32>}, {pipeline_mode = #tpu.pipeline_mode<synchronous>, transform_indices = @transform_4, window_bounds = array<i64: 32, 32>}, {pipeline_mode = #tpu.pipeline_mode<synchronous>, transform_indices = @transform_5, window_bounds = array<i64: 1, 32>}, {transform_indices = @transform_6, window_bounds = array<i64: 1, 4, 8, 8>}, {transform_indices = @transform_7, window_bounds = array<i64: 1, 4, 8, 8>}]} {
    %c0 = arith.constant 0 : index
    %c0_0 = arith.constant 0 : index
    %c0_1 = arith.constant 0 : index
    %0 = vector.load %arg2[%c0, %c0_0, %c0_1] : memref<1x8x32xf32, #tpu.memory_space<vmem>>, vector<1x8x32xf32>
    %1 = vector.shape_cast %0 : vector<1x8x32xf32> to vector<8x32xf32>
    %2 = arith.truncf %1 : vector<8x32xf32> to vector<8x32xbf16>
    %c0_2 = arith.constant 0 : index
    %c0_3 = arith.constant 0 : index
    %c0_4 = arith.constant 0 : index
    %3 = vector.load %arg3[%c0_2, %c0_3, %c0_4] : memref<1x8x32xf32, #tpu.memory_space<vmem>>, vector<1x8x32xf32>
    %4 = vector.shape_cast %3 : vector<1x8x32xf32> to vector<8x32xf32>
    %5 = arith.truncf %4 : vector<8x32xf32> to vector<8x32xbf16>
    %c0_5 = arith.constant 0 : index
    %c0_6 = arith.constant 0 : index
    %6 = vector.load %arg4[%c0_5, %c0_6] : memref<32x32xbf16, #tpu.memory_space<vmem>>, vector<32x32xbf16>
    %cst = arith.constant dense<0.000000e+00> : vector<8x32xf32>
    %7 = tpu.matmul %2, %6, %cst {dimension_numbers = #tpu.dot_dimension_numbers<[1], [0], [0], [1], [0, 0, 1, 1], [], []>} : vector<8x32xbf16>, vector<32x32xbf16>, vector<8x32xf32> -> vector<8x32xf32>
    %c0_7 = arith.constant 0 : index
    %c0_8 = arith.constant 0 : index
    %8 = vector.load %arg5[%c0_7, %c0_8] : memref<1x32xf32, #tpu.memory_space<vmem>>, vector<1x32xf32>
    %9 = vector.broadcast %8 : vector<1x32xf32> to vector<8x32xf32>
    %10 = arith.addf %7, %9 : vector<8x32xf32>
    %cst_9 = arith.constant 0.353553385 : f32
    %11 = vector.broadcast %cst_9 : f32 to vector<8x32xf32>
    %12 = arith.mulf %10, %11 : vector<8x32xf32>
    %c0_10 = arith.constant 0 : index
    %c0_11 = arith.constant 0 : index
    %13 = vector.load %arg6[%c0_10, %c0_11] : memref<32x32xbf16, #tpu.memory_space<vmem>>, vector<32x32xbf16>
    %cst_12 = arith.constant dense<0.000000e+00> : vector<8x32xf32>
    %14 = tpu.matmul %5, %13, %cst_12 {dimension_numbers = #tpu.dot_dimension_numbers<[1], [0], [0], [1], [0, 0, 1, 1], [], []>} : vector<8x32xbf16>, vector<32x32xbf16>, vector<8x32xf32> -> vector<8x32xf32>
    %c0_13 = arith.constant 0 : index
    %c0_14 = arith.constant 0 : index
    %15 = vector.load %arg7[%c0_13, %c0_14] : memref<1x32xf32, #tpu.memory_space<vmem>>, vector<1x32xf32>
    %16 = vector.broadcast %15 : vector<1x32xf32> to vector<8x32xf32>
    %17 = arith.addf %14, %16 : vector<8x32xf32>
    %18 = vector.extract_strided_slice %12 {offsets = [0, 0], sizes = [8, 8], strides = [1, 1]} : vector<8x32xf32> to vector<8x8xf32>
    %19 = arith.truncf %18 : vector<8x8xf32> to vector<8x8xbf16>
    %c0_15 = arith.constant 0 : index
    %c0_16 = arith.constant 0 : index
    %c0_17 = arith.constant 0 : index
    %c0_18 = arith.constant 0 : index
    %20 = vector.load %arg8[%c0_15, %c0_16, %c0_17, %c0_18] : memref<1x4x8x8xbf16, #tpu.memory_space<vmem>>, vector<1x1x8x8xbf16>
    %21 = vector.shape_cast %20 : vector<1x1x8x8xbf16> to vector<8x8xbf16>
    %22 = vector.shape_cast %19 : vector<8x8xbf16> to vector<1x1x8x8xbf16>
    tpu.vector_store %arg8[%c0_15, %c0_16, %c0_17, %c0_18], %22 {strides = array<i32>} : memref<1x4x8x8xbf16, #tpu.memory_space<vmem>>, vector<1x1x8x8xbf16>,
    %23 = vector.extract_strided_slice %17 {offsets = [0, 0], sizes = [8, 8], strides = [1, 1]} : vector<8x32xf32> to vector<8x8xf32>
    %24 = arith.truncf %23 : vector<8x8xf32> to vector<8x8xbf16>
    %c0_19 = arith.constant 0 : index
    %c0_20 = arith.constant 0 : index
    %c0_21 = arith.constant 0 : index
    %c0_22 = arith.constant 0 : index
    %25 = vector.load %arg9[%c0_19, %c0_20, %c0_21, %c0_22] : memref<1x4x8x8xbf16, #tpu.memory_space<vmem>>, vector<1x1x8x8xbf16>
    %26 = vector.shape_cast %25 : vector<1x1x8x8xbf16> to vector<8x8xbf16>
    %27 = vector.shape_cast %24 : vector<8x8xbf16> to vector<1x1x8x8xbf16>
    tpu.vector_store %arg9[%c0_19, %c0_20, %c0_21, %c0_22], %27 {strides = array<i32>} : memref<1x4x8x8xbf16, #tpu.memory_space<vmem>>, vector<1x1x8x8xbf16>,
    %28 = vector.extract_strided_slice %12 {offsets = [0, 8], sizes = [8, 8], strides = [1, 1]} : vector<8x32xf32> to vector<8x8xf32>
    %29 = arith.truncf %28 : vector<8x8xf32> to vector<8x8xbf16>
    %c0_23 = arith.constant 0 : index
    %c1 = arith.constant 1 : index
    %c0_24 = arith.constant 0 : index
    %c0_25 = arith.constant 0 : index
    %30 = vector.load %arg8[%c0_23, %c1, %c0_24, %c0_25] : memref<1x4x8x8xbf16, #tpu.memory_space<vmem>>, vector<1x1x8x8xbf16>
    %31 = vector.shape_cast %30 : vector<1x1x8x8xbf16> to vector<8x8xbf16>
    %32 = vector.shape_cast %29 : vector<8x8xbf16> to vector<1x1x8x8xbf16>
    tpu.vector_store %arg8[%c0_23, %c1, %c0_24, %c0_25], %32 {strides = array<i32>} : memref<1x4x8x8xbf16, #tpu.memory_space<vmem>>, vector<1x1x8x8xbf16>,
    %33 = vector.extract_strided_slice %17 {offsets = [0, 8], sizes = [8, 8], strides = [1, 1]} : vector<8x32xf32> to vector<8x8xf32>
    %34 = arith.truncf %33 : vector<8x8xf32> to vector<8x8xbf16>
    %c0_26 = arith.constant 0 : index
    %c1_27 = arith.constant 1 : index
    %c0_28 = arith.constant 0 : index
    %c0_29 = arith.constant 0 : index
    %35 = vector.load %arg9[%c0_26, %c1_27, %c0_28, %c0_29] : memref<1x4x8x8xbf16, #tpu.memory_space<vmem>>, vector<1x1x8x8xbf16>
    %36 = vector.shape_cast %35 : vector<1x1x8x8xbf16> to vector<8x8xbf16>
    %37 = vector.shape_cast %34 : vector<8x8xbf16> to vector<1x1x8x8xbf16>
    tpu.vector_store %arg9[%c0_26, %c1_27, %c0_28, %c0_29], %37 {strides = array<i32>} : memref<1x4x8x8xbf16, #tpu.memory_space<vmem>>, vector<1x1x8x8xbf16>,
    %38 = vector.extract_strided_slice %12 {offsets = [0, 16], sizes = [8, 8], strides = [1, 1]} : vector<8x32xf32> to vector<8x8xf32>
    %39 = arith.truncf %38 : vector<8x8xf32> to vector<8x8xbf16>
    %c0_30 = arith.constant 0 : index
    %c2 = arith.constant 2 : index
    %c0_31 = arith.constant 0 : index
    %c0_32 = arith.constant 0 : index
    %40 = vector.load %arg8[%c0_30, %c2, %c0_31, %c0_32] : memref<1x4x8x8xbf16, #tpu.memory_space<vmem>>, vector<1x1x8x8xbf16>
    %41 = vector.shape_cast %40 : vector<1x1x8x8xbf16> to vector<8x8xbf16>
    %42 = vector.shape_cast %39 : vector<8x8xbf16> to vector<1x1x8x8xbf16>
    tpu.vector_store %arg8[%c0_30, %c2, %c0_31, %c0_32], %42 {strides = array<i32>} : memref<1x4x8x8xbf16, #tpu.memory_space<vmem>>, vector<1x1x8x8xbf16>,
    %43 = vector.extract_strided_slice %17 {offsets = [0, 16], sizes = [8, 8], strides = [1, 1]} : vector<8x32xf32> to vector<8x8xf32>
    %44 = arith.truncf %43 : vector<8x8xf32> to vector<8x8xbf16>
    %c0_33 = arith.constant 0 : index
    %c2_34 = arith.constant 2 : index
    %c0_35 = arith.constant 0 : index
    %c0_36 = arith.constant 0 : index
    %45 = vector.load %arg9[%c0_33, %c2_34, %c0_35, %c0_36] : memref<1x4x8x8xbf16, #tpu.memory_space<vmem>>, vector<1x1x8x8xbf16>
    %46 = vector.shape_cast %45 : vector<1x1x8x8xbf16> to vector<8x8xbf16>
    %47 = vector.shape_cast %44 : vector<8x8xbf16> to vector<1x1x8x8xbf16>
    tpu.vector_store %arg9[%c0_33, %c2_34, %c0_35, %c0_36], %47 {strides = array<i32>} : memref<1x4x8x8xbf16, #tpu.memory_space<vmem>>, vector<1x1x8x8xbf16>,
    %48 = vector.extract_strided_slice %12 {offsets = [0, 24], sizes = [8, 8], strides = [1, 1]} : vector<8x32xf32> to vector<8x8xf32>
    %49 = arith.truncf %48 : vector<8x8xf32> to vector<8x8xbf16>
    %c0_37 = arith.constant 0 : index
    %c3 = arith.constant 3 : index
    %c0_38 = arith.constant 0 : index
    %c0_39 = arith.constant 0 : index
    %50 = vector.load %arg8[%c0_37, %c3, %c0_38, %c0_39] : memref<1x4x8x8xbf16, #tpu.memory_space<vmem>>, vector<1x1x8x8xbf16>
    %51 = vector.shape_cast %50 : vector<1x1x8x8xbf16> to vector<8x8xbf16>
    %52 = vector.shape_cast %49 : vector<8x8xbf16> to vector<1x1x8x8xbf16>
    tpu.vector_store %arg8[%c0_37, %c3, %c0_38, %c0_39], %52 {strides = array<i32>} : memref<1x4x8x8xbf16, #tpu.memory_space<vmem>>, vector<1x1x8x8xbf16>,
    %53 = vector.extract_strided_slice %17 {offsets = [0, 24], sizes = [8, 8], strides = [1, 1]} : vector<8x32xf32> to vector<8x8xf32>
    %54 = arith.truncf %53 : vector<8x8xf32> to vector<8x8xbf16>
    %c0_40 = arith.constant 0 : index
    %c3_41 = arith.constant 3 : index
    %c0_42 = arith.constant 0 : index
    %c0_43 = arith.constant 0 : index
    %55 = vector.load %arg9[%c0_40, %c3_41, %c0_42, %c0_43] : memref<1x4x8x8xbf16, #tpu.memory_space<vmem>>, vector<1x1x8x8xbf16>
    %56 = vector.shape_cast %55 : vector<1x1x8x8xbf16> to vector<8x8xbf16>
    %57 = vector.shape_cast %54 : vector<8x8xbf16> to vector<1x1x8x8xbf16>
    tpu.vector_store %arg9[%c0_40, %c3_41, %c0_42, %c0_43], %57 {strides = array<i32>} : memref<1x4x8x8xbf16, #tpu.memory_space<vmem>>, vector<1x1x8x8xbf16>,
    return
  }
  func.func @transform_0(%arg0: i32, %arg1: i32) -> (i32, i32, i32) {
    %c0_i32 = arith.constant 0 : i32
    %c0_i32_0 = arith.constant 0 : i32
    return %arg0, %arg1, %c0_i32 : i32, i32, i32
  }
  func.func @transform_1(%arg0: i32, %arg1: i32) -> (i32, i32, i32) {
    %c0_i32 = arith.constant 0 : i32
    %c0_i32_0 = arith.constant 0 : i32
    return %arg0, %arg1, %c0_i32 : i32, i32, i32
  }
  func.func @transform_2(%arg0: i32, %arg1: i32) -> (i32, i32) {
    %c0_i32 = arith.constant 0 : i32
    %c0_i32_0 = arith.constant 0 : i32
    %c0_i32_1 = arith.constant 0 : i32
    return %c0_i32, %c0_i32_0 : i32, i32
  }
  func.func @transform_3(%arg0: i32, %arg1: i32) -> (i32, i32) {
    %c0_i32 = arith.constant 0 : i32
    %c0_i32_0 = arith.constant 0 : i32
    %c0_i32_1 = arith.constant 0 : i32
    return %c0_i32, %c0_i32_0 : i32, i32
  }
  func.func @transform_4(%arg0: i32, %arg1: i32) -> (i32, i32) {
    %c0_i32 = arith.constant 0 : i32
    %c0_i32_0 = arith.constant 0 : i32
    %c0_i32_1 = arith.constant 0 : i32
    return %c0_i32, %c0_i32_0 : i32, i32
  }
  func.func @transform_5(%arg0: i32, %arg1: i32) -> (i32, i32) {
    %c0_i32 = arith.constant 0 : i32
    %c0_i32_0 = arith.constant 0 : i32
    %c0_i32_1 = arith.constant 0 : i32
    return %c0_i32, %c0_i32_0 : i32, i32
  }
  func.func @transform_6(%arg0: i32, %arg1: i32) -> (i32, i32, i32, i32) {
    %c0_i32 = arith.constant 0 : i32
    %c0_i32_0 = arith.constant 0 : i32
    %c0_i32_1 = arith.constant 0 : i32
    return %arg0, %c0_i32, %arg1, %c0_i32_0 : i32, i32, i32, i32
  }
  func.func @transform_7(%arg0: i32, %arg1: i32) -> (i32, i32, i32, i32) {
    %c0_i32 = arith.constant 0 : i32
    %c0_i32_0 = arith.constant 0 : i32
    %c0_i32_1 = arith.constant 0 : i32
    return %arg0, %c0_i32, %arg1, %c0_i32_0 : i32, i32, i32, i32
  }
}

module attributes {stable_mosaic.version = 11 : i64} {
  func.func @_flash_attn_fused_kernel(%arg0: i32, %arg1: i32, %arg2: i32, %arg3: memref<1x4x8x8xbf16, #tpu.memory_space<vmem>>, %arg4: memref<1x4x8x8xbf16, #tpu.memory_space<vmem>>, %arg5: memref<4x8x32xbf16, #tpu.memory_space<vmem>>, %arg6: memref<1x32xf32, #tpu.memory_space<vmem>>, %arg7: memref<1x8x32xf32, #tpu.memory_space<vmem>>, %arg8: memref<4x8x1xf32, #tpu.memory_space<vmem>>, %arg9: memref<4x8x1xf32, #tpu.memory_space<vmem>>, %arg10: memref<4x8x8xf32, #tpu.memory_space<vmem>>) attributes {dimension_semantics = [#tpu.dimension_semantics<parallel>, #tpu.dimension_semantics<parallel>, #tpu.dimension_semantics<arbitrary>], iteration_bounds = array<i64: 2, 1, 1>, scalar_prefetch = 0 : i64, scratch_operands = 3 : i64, tpu.core_type = #tpu.core_type<tc>, window_params = [{transform_indices = @transform_0, window_bounds = array<i64: 1, 4, 8, 8>}, {transform_indices = @transform_1, window_bounds = array<i64: 1, 4, 8, 8>}, {pipeline_mode = #tpu.pipeline_mode<synchronous>, transform_indices = @transform_2, window_bounds = array<i64: 4, 8, 32>}, {pipeline_mode = #tpu.pipeline_mode<synchronous>, transform_indices = @transform_3, window_bounds = array<i64: 1, 32>}, {transform_indices = @transform_4, window_bounds = array<i64: 1, 8, 32>}]} {
    %c0_i32 = arith.constant 0 : i32
    %0 = arith.cmpi eq, %arg2, %c0_i32 : i32
    %1 = arith.extui %0 : i1 to i32
    %c0_i32_0 = arith.constant 0 : i32
    %2 = arith.cmpi ne, %1, %c0_i32_0 : i32
    scf.if %2 {
      %cst_31 = arith.constant 0xFF800000 : f32
      %34 = vector.broadcast %cst_31 : f32 to vector<4x8x1xf32>
      %c0_32 = arith.constant 0 : index
      %c0_33 = arith.constant 0 : index
      %c0_34 = arith.constant 0 : index
      %35 = vector.load %arg8[%c0_32, %c0_33, %c0_34] : memref<4x8x1xf32, #tpu.memory_space<vmem>>, vector<4x8x1xf32>
      tpu.vector_store %arg8[%c0_32, %c0_33, %c0_34], %34 {strides = array<i32>} : memref<4x8x1xf32, #tpu.memory_space<vmem>>, vector<4x8x1xf32>,
      %cst_35 = arith.constant 0.000000e+00 : f32
      %36 = vector.broadcast %cst_35 : f32 to vector<4x8x1xf32>
      %c0_36 = arith.constant 0 : index
      %c0_37 = arith.constant 0 : index
      %c0_38 = arith.constant 0 : index
      %37 = vector.load %arg9[%c0_36, %c0_37, %c0_38] : memref<4x8x1xf32, #tpu.memory_space<vmem>>, vector<4x8x1xf32>
      tpu.vector_store %arg9[%c0_36, %c0_37, %c0_38], %36 {strides = array<i32>} : memref<4x8x1xf32, #tpu.memory_space<vmem>>, vector<4x8x1xf32>,
      %cst_39 = arith.constant 0.000000e+00 : f32
      %38 = vector.broadcast %cst_39 : f32 to vector<4x8x8xf32>
      %c0_40 = arith.constant 0 : index
      %c0_41 = arith.constant 0 : index
      %c0_42 = arith.constant 0 : index
      %39 = vector.load %arg10[%c0_40, %c0_41, %c0_42] : memref<4x8x8xf32, #tpu.memory_space<vmem>>, vector<4x8x8xf32>
      tpu.vector_store %arg10[%c0_40, %c0_41, %c0_42], %38 {strides = array<i32>} : memref<4x8x8xf32, #tpu.memory_space<vmem>>, vector<4x8x8xf32>,
    } else {
    }
    %c0 = arith.constant 0 : index
    %c0_1 = arith.constant 0 : index
    %c0_2 = arith.constant 0 : index
    %c0_3 = arith.constant 0 : index
    %3 = vector.load %arg3[%c0, %c0_1, %c0_2, %c0_3] : memref<1x4x8x8xbf16, #tpu.memory_space<vmem>>, vector<1x4x8x8xbf16>
    %4 = vector.shape_cast %3 : vector<1x4x8x8xbf16> to vector<4x8x8xbf16>
    %c0_4 = arith.constant 0 : index
    %c0_5 = arith.constant 0 : index
    %c0_6 = arith.constant 0 : index
    %c0_7 = arith.constant 0 : index
    %5 = vector.load %arg4[%c0_4, %c0_5, %c0_6, %c0_7] : memref<1x4x8x8xbf16, #tpu.memory_space<vmem>>, vector<1x4x8x8xbf16>
    %6 = vector.shape_cast %5 : vector<1x4x8x8xbf16> to vector<4x8x8xbf16>
    "tpu.trace_start"() <{level = 10 : i32, message = "hqd,hkd->hqk"}> : () -> ()
    %cst = arith.constant dense<0.000000e+00> : vector<4x8x8xf32>
    %7 = tpu.matmul %4, %6, %cst {dimension_numbers = #tpu.dot_dimension_numbers<[2], [2], [1], [1], [0, 0, 0, 1, 1, 1], [0], [0]>} : vector<4x8x8xbf16>, vector<4x8x8xbf16>, vector<4x8x8xf32> -> vector<4x8x8xf32>
    "tpu.trace_stop"() : () -> ()
    %c0_8 = arith.constant 0 : index
    %c0_9 = arith.constant 0 : index
    %c0_10 = arith.constant 0 : index
    %8 = vector.load %arg8[%c0_8, %c0_9, %c0_10] : memref<4x8x1xf32, #tpu.memory_space<vmem>>, vector<4x8x1xf32>
    %cst_11 = arith.constant dense<0xFF800000> : vector<4x8xf32>
    %9 = vector.multi_reduction <maximumf>, %7, %cst_11 [2] : vector<4x8x8xf32> to vector<4x8xf32>
    %10 = vector.shape_cast %9 : vector<4x8xf32> to vector<4x8x1xf32>
    %11 = arith.maximumf %8, %10 : vector<4x8x1xf32>
    %12 = arith.subf %8, %11 : vector<4x8x1xf32>
    %13 = math.exp %12 : vector<4x8x1xf32>
    %14 = vector.broadcast %11 : vector<4x8x1xf32> to vector<4x8x8xf32>
    %15 = arith.subf %7, %14 : vector<4x8x8xf32>
    %16 = math.exp %15 : vector<4x8x8xf32>
    %c0_12 = arith.constant 0 : index
    %c0_13 = arith.constant 0 : index
    %c0_14 = arith.constant 0 : index
    %17 = vector.load %arg9[%c0_12, %c0_13, %c0_14] : memref<4x8x1xf32, #tpu.memory_space<vmem>>, vector<4x8x1xf32>
    %18 = arith.mulf %13, %17 : vector<4x8x1xf32>
    %cst_15 = arith.constant dense<0.000000e+00> : vector<4x8xf32>
    %19 = vector.multi_reduction <add>, %16, %cst_15 [2] : vector<4x8x8xf32> to vector<4x8xf32>
    %20 = vector.shape_cast %19 : vector<4x8xf32> to vector<4x8x1xf32>
    %21 = arith.addf %18, %20 : vector<4x8x1xf32>
    %c0_16 = arith.constant 0 : index
    %c0_17 = arith.constant 0 : index
    %c0_18 = arith.constant 0 : index
    %22 = vector.load %arg9[%c0_16, %c0_17, %c0_18] : memref<4x8x1xf32, #tpu.memory_space<vmem>>, vector<4x8x1xf32>
    tpu.vector_store %arg9[%c0_16, %c0_17, %c0_18], %21 {strides = array<i32>} : memref<4x8x1xf32, #tpu.memory_space<vmem>>, vector<4x8x1xf32>,
    %c0_19 = arith.constant 0 : index
    %c0_20 = arith.constant 0 : index
    %c0_21 = arith.constant 0 : index
    %23 = vector.load %arg10[%c0_19, %c0_20, %c0_21] : memref<4x8x8xf32, #tpu.memory_space<vmem>>, vector<4x8x8xf32>
    %24 = vector.broadcast %13 : vector<4x8x1xf32> to vector<4x8x8xf32>
    %25 = arith.mulf %24, %23 : vector<4x8x8xf32>
    %26 = arith.truncf %16 : vector<4x8x8xf32> to vector<4x8x8xbf16>
    "tpu.trace_start"() <{level = 10 : i32, message = "hqk,hkd->hqd"}> : () -> ()
    %cst_22 = arith.constant dense<0.000000e+00> : vector<4x8x8xf32>
    %27 = tpu.matmul %26, %6, %cst_22 {dimension_numbers = #tpu.dot_dimension_numbers<[2], [1], [1], [2], [0, 0, 0, 1, 1, 2], [0], [0]>} : vector<4x8x8xbf16>, vector<4x8x8xbf16>, vector<4x8x8xf32> -> vector<4x8x8xf32>
    "tpu.trace_stop"() : () -> ()
    %28 = arith.addf %25, %27 : vector<4x8x8xf32>
    %c0_23 = arith.constant 0 : index
    %c0_24 = arith.constant 0 : index
    %c0_25 = arith.constant 0 : index
    %29 = vector.load %arg10[%c0_23, %c0_24, %c0_25] : memref<4x8x8xf32, #tpu.memory_space<vmem>>, vector<4x8x8xf32>
    tpu.vector_store %arg10[%c0_23, %c0_24, %c0_25], %28 {strides = array<i32>} : memref<4x8x8xf32, #tpu.memory_space<vmem>>, vector<4x8x8xf32>,
    %c0_26 = arith.constant 0 : index
    %c0_27 = arith.constant 0 : index
    %c0_28 = arith.constant 0 : index
    %30 = vector.load %arg8[%c0_26, %c0_27, %c0_28] : memref<4x8x1xf32, #tpu.memory_space<vmem>>, vector<4x8x1xf32>
    tpu.vector_store %arg8[%c0_26, %c0_27, %c0_28], %11 {strides = array<i32>} : memref<4x8x1xf32, #tpu.memory_space<vmem>>, vector<4x8x1xf32>,
    %c0_i32_29 = arith.constant 0 : i32
    %31 = arith.cmpi eq, %arg2, %c0_i32_29 : i32
    %32 = arith.extui %31 : i1 to i32
    %c0_i32_30 = arith.constant 0 : i32
    %33 = arith.cmpi ne, %32, %c0_i32_30 : i32
    scf.if %33 {
      %c0_31 = arith.constant 0 : index
      %c0_32 = arith.constant 0 : index
      %c0_33 = arith.constant 0 : index
      %34 = vector.load %arg9[%c0_31, %c0_32, %c0_33] : memref<4x8x1xf32, #tpu.memory_space<vmem>>, vector<4x8x1xf32>
      %35 = tpu.reciprocal %34 {approx = true} : vector<4x8x1xf32> -> vector<4x8x1xf32>
      %c0_34 = arith.constant 0 : index
      %c0_35 = arith.constant 0 : index
      %c0_36 = arith.constant 0 : index
      %36 = vector.load %arg10[%c0_34, %c0_35, %c0_36] : memref<4x8x8xf32, #tpu.memory_space<vmem>>, vector<4x8x8xf32>
      %37 = vector.broadcast %35 : vector<4x8x1xf32> to vector<4x8x8xf32>
      %38 = arith.mulf %36, %37 : vector<4x8x8xf32>
      %39 = arith.truncf %38 : vector<4x8x8xf32> to vector<4x8x8xbf16>
      %40 = vector.extract_strided_slice %39 {offsets = [0, 0, 0], sizes = [1, 8, 8], strides = [1, 1, 1]} : vector<4x8x8xbf16> to vector<1x8x8xbf16>
      %41 = vector.shape_cast %40 : vector<1x8x8xbf16> to vector<8x8xbf16>
      %c0_37 = arith.constant 0 : index
      %c0_38 = arith.constant 0 : index
      %c0_39 = arith.constant 0 : index
      %42 = vector.load %arg5[%c0_37, %c0_38, %c0_39] : memref<4x8x32xbf16, #tpu.memory_space<vmem>>, vector<1x8x32xbf16>
      %43 = vector.shape_cast %42 : vector<1x8x32xbf16> to vector<8x32xbf16>
      %cst_40 = arith.constant dense<0.000000e+00> : vector<8x32xf32>
      %44 = tpu.matmul %41, %43, %cst_40 {dimension_numbers = #tpu.dot_dimension_numbers<[1], [0], [0], [1], [0, 0, 1, 1], [], []>} : vector<8x8xbf16>, vector<8x32xbf16>, vector<8x32xf32> -> vector<8x32xf32>
      %45 = vector.extract_strided_slice %39 {offsets = [1, 0, 0], sizes = [1, 8, 8], strides = [1, 1, 1]} : vector<4x8x8xbf16> to vector<1x8x8xbf16>
      %46 = vector.shape_cast %45 : vector<1x8x8xbf16> to vector<8x8xbf16>
      %c1 = arith.constant 1 : index
      %c0_41 = arith.constant 0 : index
      %c0_42 = arith.constant 0 : index
      %47 = vector.load %arg5[%c1, %c0_41, %c0_42] : memref<4x8x32xbf16, #tpu.memory_space<vmem>>, vector<1x8x32xbf16>
      %48 = vector.shape_cast %47 : vector<1x8x32xbf16> to vector<8x32xbf16>
      %cst_43 = arith.constant dense<0.000000e+00> : vector<8x32xf32>
      %49 = tpu.matmul %46, %48, %cst_43 {dimension_numbers = #tpu.dot_dimension_numbers<[1], [0], [0], [1], [0, 0, 1, 1], [], []>} : vector<8x8xbf16>, vector<8x32xbf16>, vector<8x32xf32> -> vector<8x32xf32>
      %50 = arith.addf %44, %49 : vector<8x32xf32>
      %51 = vector.extract_strided_slice %39 {offsets = [2, 0, 0], sizes = [1, 8, 8], strides = [1, 1, 1]} : vector<4x8x8xbf16> to vector<1x8x8xbf16>
      %52 = vector.shape_cast %51 : vector<1x8x8xbf16> to vector<8x8xbf16>
      %c2 = arith.constant 2 : index
      %c0_44 = arith.constant 0 : index
      %c0_45 = arith.constant 0 : index
      %53 = vector.load %arg5[%c2, %c0_44, %c0_45] : memref<4x8x32xbf16, #tpu.memory_space<vmem>>, vector<1x8x32xbf16>
      %54 = vector.shape_cast %53 : vector<1x8x32xbf16> to vector<8x32xbf16>
      %cst_46 = arith.constant dense<0.000000e+00> : vector<8x32xf32>
      %55 = tpu.matmul %52, %54, %cst_46 {dimension_numbers = #tpu.dot_dimension_numbers<[1], [0], [0], [1], [0, 0, 1, 1], [], []>} : vector<8x8xbf16>, vector<8x32xbf16>, vector<8x32xf32> -> vector<8x32xf32>
      %56 = arith.addf %50, %55 : vector<8x32xf32>
      %57 = vector.extract_strided_slice %39 {offsets = [3, 0, 0], sizes = [1, 8, 8], strides = [1, 1, 1]} : vector<4x8x8xbf16> to vector<1x8x8xbf16>
      %58 = vector.shape_cast %57 : vector<1x8x8xbf16> to vector<8x8xbf16>
      %c3 = arith.constant 3 : index
      %c0_47 = arith.constant 0 : index
      %c0_48 = arith.constant 0 : index
      %59 = vector.load %arg5[%c3, %c0_47, %c0_48] : memref<4x8x32xbf16, #tpu.memory_space<vmem>>, vector<1x8x32xbf16>
      %60 = vector.shape_cast %59 : vector<1x8x32xbf16> to vector<8x32xbf16>
      %cst_49 = arith.constant dense<0.000000e+00> : vector<8x32xf32>
      %61 = tpu.matmul %58, %60, %cst_49 {dimension_numbers = #tpu.dot_dimension_numbers<[1], [0], [0], [1], [0, 0, 1, 1], [], []>} : vector<8x8xbf16>, vector<8x32xbf16>, vector<8x32xf32> -> vector<8x32xf32>
      %62 = arith.addf %56, %61 : vector<8x32xf32>
      %c0_50 = arith.constant 0 : index
      %c0_51 = arith.constant 0 : index
      %63 = vector.load %arg6[%c0_50, %c0_51] : memref<1x32xf32, #tpu.memory_space<vmem>>, vector<1x32xf32>
      %64 = vector.broadcast %63 : vector<1x32xf32> to vector<8x32xf32>
      %65 = arith.addf %62, %64 : vector<8x32xf32>
      %c0_52 = arith.constant 0 : index
      %c0_53 = arith.constant 0 : index
      %c0_54 = arith.constant 0 : index
      %66 = vector.load %arg7[%c0_52, %c0_53, %c0_54] : memref<1x8x32xf32, #tpu.memory_space<vmem>>, vector<1x8x32xf32>
      %67 = vector.shape_cast %66 : vector<1x8x32xf32> to vector<8x32xf32>
      %68 = vector.shape_cast %65 : vector<8x32xf32> to vector<1x8x32xf32>
      tpu.vector_store %arg7[%c0_52, %c0_53, %c0_54], %68 {strides = array<i32>} : memref<1x8x32xf32, #tpu.memory_space<vmem>>, vector<1x8x32xf32>,
    } else {
    }
    return
  }
  func.func @transform_0(%arg0: i32, %arg1: i32, %arg2: i32) -> (i32, i32, i32, i32) {
    %c0_i32 = arith.constant 0 : i32
    %c0_i32_0 = arith.constant 0 : i32
    %c0_i32_1 = arith.constant 0 : i32
    return %arg0, %c0_i32, %arg1, %c0_i32_0 : i32, i32, i32, i32
  }
  func.func @transform_1(%arg0: i32, %arg1: i32, %arg2: i32) -> (i32, i32, i32, i32) {
    %c0_i32 = arith.constant 0 : i32
    %c0_i32_0 = arith.constant 0 : i32
    %c0_i32_1 = arith.constant 0 : i32
    return %arg0, %c0_i32, %arg2, %c0_i32_0 : i32, i32, i32, i32
  }
  func.func @transform_2(%arg0: i32, %arg1: i32, %arg2: i32) -> (i32, i32, i32) {
    %c0_i32 = arith.constant 0 : i32
    %c0_i32_0 = arith.constant 0 : i32
    %c0_i32_1 = arith.constant 0 : i32
    %c0_i32_2 = arith.constant 0 : i32
    return %c0_i32, %c0_i32_0, %c0_i32_1 : i32, i32, i32
  }
  func.func @transform_3(%arg0: i32, %arg1: i32, %arg2: i32) -> (i32, i32) {
    %c0_i32 = arith.constant 0 : i32
    %c0_i32_0 = arith.constant 0 : i32
    %c0_i32_1 = arith.constant 0 : i32
    return %c0_i32, %c0_i32_0 : i32, i32
  }
  func.func @transform_4(%arg0: i32, %arg1: i32, %arg2: i32) -> (i32, i32, i32) {
    %c0_i32 = arith.constant 0 : i32
    %c0_i32_0 = arith.constant 0 : i32
    return %arg0, %arg1, %c0_i32 : i32, i32, i32
  }
}

</mosaic_0001>

<llo_original>
// kernel: multi_head_attention.2
$region0: #{multi_head_attention.2}
  #allocation0 [shape = 'u32[]', space=smem, size = 0x4, offset = 0x4, fixed_abs, tag = 'smem constant byte address 0x4 - core index']
  #allocation1 [shape = 'u32[144,128]{1,0:T(1,128)}', space=vmem, size = 0x12000, scoped, tag = 'internal scratch']
  %s0 = inlined_call_operand.vmem [shape: f32[2,8,32], index: 0, kind: input, shape index: {}]
  %s1 = inlined_call_operand.vmem [shape: f32[2,8,32], index: 1, kind: input, shape index: {}]
  %s2 = inlined_call_operand.vmem [shape: bf16[32,32], index: 2, kind: input, shape index: {}]
  %s3 = inlined_call_operand.vmem [shape: f32[1,32], index: 3, kind: input, shape index: {}]
  %s4 = inlined_call_operand.vmem [shape: bf16[32,32], index: 4, kind: input, shape index: {}]
  %s5 = inlined_call_operand.vmem [shape: f32[1,32], index: 5, kind: input, shape index: {}]
  %s6 = inlined_call_operand.vmem [shape: bf16[2,4,8,8], index: 6, kind: output, shape index: {0}]
  %s7 = inlined_call_operand.vmem [shape: bf16[2,4,8,8], index: 7, kind: output, shape index: {1}]
  %8 = xla_tuple %s6, %s7
  %s9 = sld [smem:[#allocation0]]
  $region65: #{multi_head_attention.2} parent=0
    _
  %s11 = ssub.s32 1, %s9
  %s12 = scalar_select 0, %s11, %s9
  loop: start=0, step=1, limit=4
  $region2: #{multi_head_attention.2} parent=0 // loop_pre_header
    _
  $region3: #{multi_head_attention.2} parent=0 // loop_header
    %s14 = sphi 0, %s18
    %p15 = scmp.ge.s32.totalorder %s14, 4
    %s21 = sphi 0, %s33
    %s22 = sphi 0, %s29
    %s23 = sphi 0, %s21
    %s24 = sphi 0, %s22
    %s25 = sphi 0, %s23
    %s26 = sphi 0, %s24
    %s38 = sphi 0, %s40
    %s41 = sphi 0, %s38
    %s42 = sphi 0, %s41
    %s58 = sphi 0, %s42
    %s66 = sphi 0, %s68
    %s69 = sphi 0, %s66
    %s70 = sphi 0, %s69
    %s86 = sphi 0, %s70
    %s90 = sphi 0, %s90
    %s92 = sphi 0, %s90
    %s93 = sphi 0, %s92
    %s107 = sphi 0, %s93
    %s111 = sphi 0, %s111
    %s113 = sphi 0, %s111
    %s114 = sphi 0, %s113
    %s128 = sphi 0, %s114
    %s132 = sphi 0, %s132
    %s134 = sphi 0, %s132
    %s135 = sphi 0, %s134
    %s149 = sphi 0, %s135
    %s153 = sphi 0, %s153
    %s155 = sphi 0, %s153
    %s156 = sphi 0, %s155
    %s170 = sphi 0, %s156
    %s178 = sphi 0, %s180
    %s181 = sphi 0, %s178
    %s182 = sphi 0, %s181
    %s198 = sphi 0, %s182
    %s206 = sphi 0, %s208
    %s209 = sphi 0, %s206
    %s210 = sphi 0, %s209
    %s226 = sphi 0, %s210
  $region4: #{multi_head_attention.2} parent=0 // loop_header_branch
    %17 = sbr.rel (%p15) target = $region8
  $region5: #{multi_head_attention.2} parent=0 // loop_body
    %s19 = ssub.s32 %s14, 1
    %s20 = ssub.s32 %s14, 2
    %s27 = sadd.s32 1, %s22
    %p28 = scmp.ge.s32.totalorder %s27, 1
    %s29 = scalar_select %p28, 0, %s27
    %s30 = sadd.s32 1, %s21
    %s31 = scalar_select %p28, %s30, %s21
    %p32 = scmp.ge.s32.totalorder %s31, 2
    %s33 = scalar_select %p32, 0, %s31
    %s34 = ssub.s32 %s21, %s33
    %s35 = ssub.s32 %s22, %s29
    %s36 = sor.u32 %s34, %s35
    %p37 = scmp.eq.s32.totalorder %s36, 0
    %s39 = sadd.s32 %s38, 1
    %s40 = scalar_select %p37, %s38, %s39
    %p43 = pneg %p37
    %p44 = scmp.eq.s32.totalorder %s14, 1
    %p45 = por %p43, %p44
    %p46 = scmp.ne.s32.totalorder %s38, %s41
    %p47 = scmp.eq.s32.totalorder %s14, 0
    %p48 = por %p46, %p47
    %p49 = scmp.ne.s32.totalorder %s38, %s41
    %p50 = scmp.eq.s32.totalorder %s19, 1
    %p51 = por %p49, %p50
    %p52 = scmp.ne.s32.totalorder %s41, %s42
    %p53 = scmp.eq.s32.totalorder %s19, 0
    %p54 = por %p52, %p53
    %p55 = scmp.ne.s32.totalorder %s41, %s42
    %p56 = scmp.eq.s32.totalorder %s20, 1
    %p57 = por %p55, %p56
    %p59 = scmp.ne.s32.totalorder %s42, %s58
    %p60 = scmp.eq.s32.totalorder %s20, 0
    %p61 = por %p59, %p60
    %s62 = ssub.s32 %s21, %s33
    %s63 = ssub.s32 %s22, %s29
    %s64 = sor.u32 %s62, %s63
    %p65 = scmp.eq.s32.totalorder %s64, 0
    %s67 = sadd.s32 %s66, 1
    %s68 = scalar_select %p65, %s66, %s67
    %p71 = pneg %p65
    %p72 = scmp.eq.s32.totalorder %s14, 1
    %p73 = por %p71, %p72
    %p74 = scmp.ne.s32.totalorder %s66, %s69
    %p75 = scmp.eq.s32.totalorder %s14, 0
    %p76 = por %p74, %p75
    %p77 = scmp.ne.s32.totalorder %s66, %s69
    %p78 = scmp.eq.s32.totalorder %s19, 1
    %p79 = por %p77, %p78
    %p80 = scmp.ne.s32.totalorder %s69, %s70
    %p81 = scmp.eq.s32.totalorder %s19, 0
    %p82 = por %p80, %p81
    %p83 = scmp.ne.s32.totalorder %s69, %s70
    %p84 = scmp.eq.s32.totalorder %s20, 1
    %p85 = por %p83, %p84
    %p87 = scmp.ne.s32.totalorder %s70, %s86
    %p88 = scmp.eq.s32.totalorder %s20, 0
    %p89 = por %p87, %p88
    %s91 = sadd.s32 %s90, 1
    %p94 = scmp.eq.s32.totalorder %s14, 1
    %p95 = scmp.ne.s32.totalorder %s90, %s92
    %p96 = scmp.eq.s32.totalorder %s14, 0
    %p97 = por %p95, %p96
    %p98 = scmp.ne.s32.totalorder %s90, %s92
    %p99 = scmp.eq.s32.totalorder %s19, 1
    %p100 = por %p98, %p99
    %p101 = scmp.ne.s32.totalorder %s92, %s93
    %p102 = scmp.eq.s32.totalorder %s19, 0
    %p103 = por %p101, %p102
    %p104 = scmp.ne.s32.totalorder %s92, %s93
    %p105 = scmp.eq.s32.totalorder %s20, 1
    %p106 = por %p104, %p105
    %p108 = scmp.ne.s32.totalorder %s93, %s107
    %p109 = scmp.eq.s32.totalorder %s20, 0
    %p110 = por %p108, %p109
    %s112 = sadd.s32 %s111, 1
    %p115 = scmp.eq.s32.totalorder %s14, 1
    %p116 = scmp.ne.s32.totalorder %s111, %s113
    %p117 = scmp.eq.s32.totalorder %s14, 0
    %p118 = por %p116, %p117
    %p119 = scmp.ne.s32.totalorder %s111, %s113
    %p120 = scmp.eq.s32.totalorder %s19, 1
    %p121 = por %p119, %p120
    %p122 = scmp.ne.s32.totalorder %s113, %s114
    %p123 = scmp.eq.s32.totalorder %s19, 0
    %p124 = por %p122, %p123
    %p125 = scmp.ne.s32.totalorder %s113, %s114
    %p126 = scmp.eq.s32.totalorder %s20, 1
    %p127 = por %p125, %p126
    %p129 = scmp.ne.s32.totalorder %s114, %s128
    %p130 = scmp.eq.s32.totalorder %s20, 0
    %p131 = por %p129, %p130
    %s133 = sadd.s32 %s132, 1
    %p136 = scmp.eq.s32.totalorder %s14, 1
    %p137 = scmp.ne.s32.totalorder %s132, %s134
    %p138 = scmp.eq.s32.totalorder %s14, 0
    %p139 = por %p137, %p138
    %p140 = scmp.ne.s32.totalorder %s132, %s134
    %p141 = scmp.eq.s32.totalorder %s19, 1
    %p142 = por %p140, %p141
    %p143 = scmp.ne.s32.totalorder %s134, %s135
    %p144 = scmp.eq.s32.totalorder %s19, 0
    %p145 = por %p143, %p144
    %p146 = scmp.ne.s32.totalorder %s134, %s135
    %p147 = scmp.eq.s32.totalorder %s20, 1
    %p148 = por %p146, %p147
    %p150 = scmp.ne.s32.totalorder %s135, %s149
    %p151 = scmp.eq.s32.totalorder %s20, 0
    %p152 = por %p150, %p151
    %s154 = sadd.s32 %s153, 1
    %p157 = scmp.eq.s32.totalorder %s14, 1
    %p158 = scmp.ne.s32.totalorder %s153, %s155
    %p159 = scmp.eq.s32.totalorder %s14, 0
    %p160 = por %p158, %p159
    %p161 = scmp.ne.s32.totalorder %s153, %s155
    %p162 = scmp.eq.s32.totalorder %s19, 1
    %p163 = por %p161, %p162
    %p164 = scmp.ne.s32.totalorder %s155, %s156
    %p165 = scmp.eq.s32.totalorder %s19, 0
    %p166 = por %p164, %p165
    %p167 = scmp.ne.s32.totalorder %s155, %s156
    %p168 = scmp.eq.s32.totalorder %s20, 1
    %p169 = por %p167, %p168
    %p171 = scmp.ne.s32.totalorder %s156, %s170
    %p172 = scmp.eq.s32.totalorder %s20, 0
    %p173 = por %p171, %p172
    %s174 = ssub.s32 %s21, %s33
    %s175 = ssub.s32 %s22, %s29
    %s176 = sor.u32 %s174, %s175
    %p177 = scmp.eq.s32.totalorder %s176, 0
    %s179 = sadd.s32 %s178, 1
    %s180 = scalar_select %p177, %s178, %s179
    %p183 = pneg %p177
    %p184 = scmp.eq.s32.totalorder %s14, 1
    %p185 = por %p183, %p184
    %p186 = scmp.ne.s32.totalorder %s178, %s181
    %p187 = scmp.eq.s32.totalorder %s14, 0
    %p188 = por %p186, %p187
    %p189 = scmp.ne.s32.totalorder %s178, %s181
    %p190 = scmp.eq.s32.totalorder %s19, 1
    %p191 = por %p189, %p190
    %p192 = scmp.ne.s32.totalorder %s181, %s182
    %p193 = scmp.eq.s32.totalorder %s19, 0
    %p194 = por %p192, %p193
    %p195 = scmp.ne.s32.totalorder %s181, %s182
    %p196 = scmp.eq.s32.totalorder %s20, 1
    %p197 = por %p195, %p196
    %p199 = scmp.ne.s32.totalorder %s182, %s198
    %p200 = scmp.eq.s32.totalorder %s20, 0
    %p201 = por %p199, %p200
    %s202 = ssub.s32 %s21, %s33
    %s203 = ssub.s32 %s22, %s29
    %s204 = sor.u32 %s202, %s203
    %p205 = scmp.eq.s32.totalorder %s204, 0
    %s207 = sadd.s32 %s206, 1
    %s208 = scalar_select %p205, %s206, %s207
    %p211 = pneg %p205
    %p212 = scmp.eq.s32.totalorder %s14, 1
    %p213 = por %p211, %p212
    %p214 = scmp.ne.s32.totalorder %s206, %s209
    %p215 = scmp.eq.s32.totalorder %s14, 0
    %p216 = por %p214, %p215
    %p217 = scmp.ne.s32.totalorder %s206, %s209
    %p218 = scmp.eq.s32.totalorder %s19, 1
    %p219 = por %p217, %p218
    %p220 = scmp.ne.s32.totalorder %s209, %s210
    %p221 = scmp.eq.s32.totalorder %s19, 0
    %p222 = por %p220, %p221
    %p223 = scmp.ne.s32.totalorder %s209, %s210
    %p224 = scmp.eq.s32.totalorder %s20, 1
    %p225 = por %p223, %p224
    %p227 = scmp.ne.s32.totalorder %s210, %s226
    %p228 = scmp.eq.s32.totalorder %s20, 0
    %p229 = por %p227, %p228
    %p230 = scmp.le.s32.totalorder 1, %s14
    %p231 = scmp.lt.s32.totalorder %s14, 3
    %p232 = pnand %p230, %p231
    %p233 = pneg %p232
    // Predicated region
    $region9: #{multi_head_attention.2} parent=5 // pred_check
      _
    $region10: #{multi_head_attention.2} parent=5 // pred_check_branch
      %235 = sbr.rel (%p232) target = $region12
    $region11: #{multi_head_attention.2} parent=5 // pred_region
      %s236 = ssub.s32 %s14, 1
      // Predicated region
      $region13: #{multi_head_attention.2} parent=11 // pred_check
        %p237 = pneg %p103
      $region14: #{multi_head_attention.2} parent=11 // pred_check_branch
        %239 = sbr.rel (%p237) target = $region16
      $region15: #{multi_head_attention.2} parent=11 // pred_region
        _
      $region16: #{multi_head_attention.2} parent=11 // pred_fallthru
        _
      // Predicated region
      $region17: #{multi_head_attention.2} parent=11 // pred_check
        %p240 = pneg %p124
      $region18: #{multi_head_attention.2} parent=11 // pred_check_branch
        %242 = sbr.rel (%p240) target = $region20
      $region19: #{multi_head_attention.2} parent=11 // pred_region
        _
      $region20: #{multi_head_attention.2} parent=11 // pred_fallthru
        _
      // Predicated region
      $region21: #{multi_head_attention.2} parent=11 // pred_check
        %p243 = pneg %p145
      $region22: #{multi_head_attention.2} parent=11 // pred_check_branch
        %245 = sbr.rel (%p243) target = $region24
      $region23: #{multi_head_attention.2} parent=11 // pred_region
        _
      $region24: #{multi_head_attention.2} parent=11 // pred_fallthru
        _
      // Predicated region
      $region25: #{multi_head_attention.2} parent=11 // pred_check
        %p246 = pneg %p166
      $region26: #{multi_head_attention.2} parent=11 // pred_check_branch
        %248 = sbr.rel (%p246) target = $region28
      $region27: #{multi_head_attention.2} parent=11 // pred_region
        _
      $region28: #{multi_head_attention.2} parent=11 // pred_fallthru
        _
    $region12: #{multi_head_attention.2} parent=5 // pred_fallthru
      _
    %p249 = scmp.lt.s32.totalorder %s14, 2
    // Predicated region
    $region29: #{multi_head_attention.2} parent=5 // pred_check
      %p250 = pneg %p249
    $region30: #{multi_head_attention.2} parent=5 // pred_check_branch
      %252 = sbr.rel (%p250) target = $region32
    $region31: #{multi_head_attention.2} parent=5 // pred_region
      // Predicated region
      $region33: #{multi_head_attention.2} parent=31 // pred_check
        %p253 = pneg %p48
      $region34: #{multi_head_attention.2} parent=31 // pred_check_branch
        %255 = sbr.rel (%p253) target = $region36
      $region35: #{multi_head_attention.2} parent=31 // pred_region
        %p256 = scmp.lt.s32.totalorder %s21, 1
        %s257 = scalar_select %p256, %s21, 1
        %p258 = scmp.lt.s32.totalorder %s22, 0
        %s259 = scalar_select %p258, %s22, 0
        %s260 = sadd.s32 %s259, %s257
        %s261 = smul.addr %s260, 8
        %s262 = scalar_lea.vmem %s0, %s261
      $region36: #{multi_head_attention.2} parent=31 // pred_fallthru
        _
      // Predicated region
      $region37: #{multi_head_attention.2} parent=31 // pred_check
        %p263 = pneg %p76
      $region38: #{multi_head_attention.2} parent=31 // pred_check_branch
        %265 = sbr.rel (%p263) target = $region40
      $region39: #{multi_head_attention.2} parent=31 // pred_region
        %p266 = scmp.lt.s32.totalorder %s21, 1
        %s267 = scalar_select %p266, %s21, 1
        %p268 = scmp.lt.s32.totalorder %s22, 0
        %s269 = scalar_select %p268, %s22, 0
        %s270 = sadd.s32 %s269, %s267
        %s271 = smul.addr %s270, 8
        %s272 = scalar_lea.vmem %s1, %s271
      $region40: #{multi_head_attention.2} parent=31 // pred_fallthru
        _
    $region32: #{multi_head_attention.2} parent=5 // pred_fallthru
      _
    %p273 = scmp.le.s32.totalorder 1, %s14
    %p274 = scmp.lt.s32.totalorder %s14, 3
    %p275 = pnand %p273, %p274
    %p276 = pneg %p275
    // Predicated region
    $region41: #{multi_head_attention.2} parent=5 // pred_check
      _
    $region42: #{multi_head_attention.2} parent=5 // pred_check_branch
      %278 = sbr.rel (%p275) target = $region44
    $region43: #{multi_head_attention.2} parent=5 // pred_region
      %s279 = ssub.s32 %s14, 1
      %p280 = scmp.lt.s32.totalorder %s23, 1
      %s281 = scalar_select %p280, %s23, 1
      %p282 = scmp.lt.s32.totalorder %s24, 0
      %s283 = scalar_select %p282, %s24, 0
      %s284 = sadd.s32 %s283, %s281
      %s285 = smul.addr %s284, 8
      %s286 = scalar_lea.vmem %s0, %s285
      %p287 = pneg %p54
      %p288 = pneg %p51
      %p289 = scmp.lt.s32.totalorder %s23, 1
      %s290 = scalar_select %p289, %s23, 1
      %p291 = scmp.lt.s32.totalorder %s24, 0
      %s292 = scalar_select %p291, %s24, 0
      %s293 = sadd.s32 %s292, %s290
      %s294 = smul.addr %s293, 8
      %s295 = scalar_lea.vmem %s1, %s294
      %p296 = pneg %p82
      %p297 = pneg %p79
      %p298 = pneg %p103
      %p299 = pneg %p100
      %p300 = pneg %p124
      %p301 = pneg %p121
      %p302 = pneg %p145
      %p303 = pneg %p142
      %p304 = pneg %p166
      %p305 = pneg %p163
      %p306 = pneg %p194
      %p307 = pneg %p191
      %p308 = scmp.lt.s32.totalorder %s23, 1
      %s309 = scalar_select %p308, %s23, 1
      %p310 = scmp.lt.s32.totalorder %s24, 0
      %s311 = scalar_select %p310, %s24, 0
      %s312 = smul.addr %s309, 4
      %s313 = sadd.s32 %s311, %s312
      %s314 = smul.addr %s313, 4
      %s315 = scalar_lea.vmem %s6, %s314
      %p316 = pneg %p222
      %p317 = pneg %p219
      %p318 = scmp.lt.s32.totalorder %s23, 1
      %s319 = scalar_select %p318, %s23, 1
      %p320 = scmp.lt.s32.totalorder %s24, 0
      %s321 = scalar_select %p320, %s24, 0
      %s322 = smul.addr %s319, 4
      %s323 = sadd.s32 %s321, %s322
      %s324 = smul.addr %s323, 4
      %s325 = scalar_lea.vmem %s7, %s324
      %p326 = scmp.lt.s32.totalorder %s23, 1
      %s327 = scalar_select %p326, %s23, 1
      %p328 = scmp.lt.s32.totalorder %s24, 0
      %s329 = scalar_select %p328, %s24, 0
      %s330 = sadd.s32 %s329, %s327
      %s331 = smul.addr %s330, 8
      %s332 = scalar_lea.vmem %s0, %s331
      %p333 = scmp.lt.s32.totalorder %s23, 1
      %s334 = scalar_select %p333, %s23, 1
      %p335 = scmp.lt.s32.totalorder %s24, 0
      %s336 = scalar_select %p335, %s24, 0
      %s337 = sadd.s32 %s336, %s334
      %s338 = smul.addr %s337, 8
      %s339 = scalar_lea.vmem %s1, %s338
      %p340 = scmp.lt.s32.totalorder %s23, 1
      %s341 = scalar_select %p340, %s23, 1
      %p342 = scmp.lt.s32.totalorder %s24, 0
      %s343 = scalar_select %p342, %s24, 0
      %s344 = smul.addr %s341, 4
      %s345 = sadd.s32 %s343, %s344
      %s346 = smul.addr %s345, 4
      %s347 = scalar_lea.vmem %s6, %s346
      %p348 = scmp.lt.s32.totalorder %s23, 1
      %s349 = scalar_select %p348, %s23, 1
      %p350 = scmp.lt.s32.totalorder %s24, 0
      %s351 = scalar_select %p350, %s24, 0
      %s352 = smul.addr %s349, 4
      %s353 = sadd.s32 %s351, %s352
      %s354 = smul.addr %s353, 4
      %s355 = scalar_lea.vmem %s7, %s354
      %v357 = vld [vmem:[%s332] sm:$0xff]
      %v358 = vpack.c.bf16 %v357, %v357
      %v359 = vld [vmem:[%s339] sm:$0xff]
      %v360 = vpack.c.bf16 %v359, %v359
      %v361 = vld [vmem:[%s2] sm:$0xf]
      %v362 = vld [vmem:[%s2 + $0x4] sm:$0xf]
      %v363 = vld [vmem:[%s2 + $0x8] sm:$0xf]
      %v364 = vld [vmem:[%s2 + $0xc] sm:$0xf]
      %v365 = vld [vmem:[%s3] sm:$0x1]
      %v367 = vlaneseq
      %v368 = vshrl.u32 %v367, 7
      %v369 = vsub.s32 0, %v368
      %v370 = vrot.slane %v365, %v369
      %v376 = vunpack.c.l.b16 %v361
      %v377 = vunpack.c.l.b16 %v362
      %v378 = vunpack.c.l.b16 %v363
      %v379 = vunpack.c.l.b16 %v364
      %v380 = vpack.c.b16 %v377, %v376
      %v381 = vpack.c.b16 %v379, %v378
      %vm384 = vcmask 261120
      %v386 = vsel %vm384, %v358, 0
      %388 = vmatprep.subr.bf16.mxu0 0
      %389 = vmatpush1.bf16.msra.mxu0 0
      %390 = vmatprep.subr.bf16.mxu0 0
      %391 = vmatpush1.bf16.msra.mxu0 0
      %392 = vmatprep.subr.bf16.mxu0 0
      %393 = vmatpush1.bf16.msra.mxu0 0
      %394 = vmatprep.subr.bf16.mxu0 0
      %395 = vmatpush1.bf16.msra.mxu0 0
      %396 = vmatprep.subr.bf16.mxu0 0
      %397 = vmatpush1.bf16.msra.mxu0 0
      %398 = vmatprep.subr.bf16.mxu0 0
      %399 = vmatpush1.bf16.msra.mxu0 0
      %400 = vmatprep.subr.bf16.mxu0 0
      %401 = vmatpush1.bf16.msra.mxu0 %v381
      %402 = vmatprep.subr.bf16.mxu0 0
      %403 = vmatpush1.bf16.msra.mxu0 %v380
      %404 = vmatprep.subr.bf16.mxu0 0
      %405 = vmatpush2.bf16.msra.mxu0 0
      %406 = vmatprep.subr.bf16.mxu0 0
      %407 = vmatpush2.bf16.msra.mxu0 0
      %408 = vmatprep.subr.bf16.mxu0 0
      %409 = vmatpush2.bf16.msra.mxu0 0
      %410 = vmatprep.subr.bf16.mxu0 0
      %411 = vmatpush2.bf16.msra.mxu0 0
      %412 = vmatprep.subr.bf16.mxu0 0
      %413 = vmatpush2.bf16.msra.mxu0 0
      %414 = vmatprep.subr.bf16.mxu0 0
      %415 = vmatpush2.bf16.msra.mxu0 0
      %416 = vmatprep.subr.bf16.mxu0 0
      %417 = vmatpush2.bf16.msra.mxu0 0
      %418 = vmatprep.subr.bf16.mxu0 0
      %419 = vmatpush2.bf16.msra.mxu0 0
      %420 = vmatprep.mubr.bf16.mxu0 0
      %421 = vmatmul.mubr.bf16.gmra.mxu0 %v386
      %v422 = vpop.f32.mrf.mxu0
      %v423 = vadd.f32 %v370, %v422
      %v424 = vpop.f32.mrf.mxu0
      %v425 = vpop.f32.mrf.mxu0
      %v426 = vpop.f32.mrf.mxu0
      %427 = vdwg.mxu0
      %v428 = vmul.f32 %v423, 0.35355338
      %v429 = vld [vmem:[%s4] sm:$0xf]
      %v430 = vld [vmem:[%s4 + $0x4] sm:$0xf]
      %v431 = vld [vmem:[%s4 + $0x8] sm:$0xf]
      %v432 = vld [vmem:[%s4 + $0xc] sm:$0xf]
      %v433 = vld [vmem:[%s5] sm:$0x1]
      %v435 = vlaneseq
      %v436 = vshrl.u32 %v435, 7
      %v437 = vsub.s32 0, %v436
      %v438 = vrot.slane %v433, %v437
      %v444 = vunpack.c.l.b16 %v429
      %v445 = vunpack.c.l.b16 %v430
      %v446 = vunpack.c.l.b16 %v431
      %v447 = vunpack.c.l.b16 %v432
      %v448 = vpack.c.b16 %v445, %v444
      %v449 = vpack.c.b16 %v447, %v446
      %v453 = vsel %vm384, %v360, 0
      %455 = vmatprep.subr.bf16.mxu0 0
      %456 = vmatpush1.bf16.msra.mxu0 0
      %457 = vmatprep.subr.bf16.mxu0 0
      %458 = vmatpush1.bf16.msra.mxu0 0
      %459 = vmatprep.subr.bf16.mxu0 0
      %460 = vmatpush1.bf16.msra.mxu0 0
      %461 = vmatprep.subr.bf16.mxu0 0
      %462 = vmatpush1.bf16.msra.mxu0 0
      %463 = vmatprep.subr.bf16.mxu0 0
      %464 = vmatpush1.bf16.msra.mxu0 0
      %465 = vmatprep.subr.bf16.mxu0 0
      %466 = vmatpush1.bf16.msra.mxu0 0
      %467 = vmatprep.subr.bf16.mxu0 0
      %468 = vmatpush1.bf16.msra.mxu0 %v449
      %469 = vmatprep.subr.bf16.mxu0 0
      %470 = vmatpush1.bf16.msra.mxu0 %v448
      %471 = vmatprep.subr.bf16.mxu0 0
      %472 = vmatpush2.bf16.msra.mxu0 0
      %473 = vmatprep.subr.bf16.mxu0 0
      %474 = vmatpush2.bf16.msra.mxu0 0
      %475 = vmatprep.subr.bf16.mxu0 0
      %476 = vmatpush2.bf16.msra.mxu0 0
      %477 = vmatprep.subr.bf16.mxu0 0
      %478 = vmatpush2.bf16.msra.mxu0 0
      %479 = vmatprep.subr.bf16.mxu0 0
      %480 = vmatpush2.bf16.msra.mxu0 0
      %481 = vmatprep.subr.bf16.mxu0 0
      %482 = vmatpush2.bf16.msra.mxu0 0
      %483 = vmatprep.subr.bf16.mxu0 0
      %484 = vmatpush2.bf16.msra.mxu0 0
      %485 = vmatprep.subr.bf16.mxu0 0
      %486 = vmatpush2.bf16.msra.mxu0 0
      %487 = vmatprep.mubr.bf16.mxu0 0
      %488 = vmatmul.mubr.bf16.gmra.mxu0 %v453
      %v489 = vpop.f32.mrf.mxu0
      %v490 = vadd.f32 %v438, %v489
      %v491 = vpop.f32.mrf.mxu0
      %v492 = vpop.f32.mrf.mxu0
      %v493 = vpop.f32.mrf.mxu0
      %494 = vdwg.mxu0
      %v495 = vpack.c.bf16 %v428, %v428
      %vm496 = vcmask 60416
      %497 = vst.msk [vmem:[%s347] sm:$0xf] %vm496, %v495
      %v498 = vpack.c.bf16 %v490, %v490
      %499 = vst.msk [vmem:[%s355] sm:$0xf] %vm496, %v498
      %v501 = vunpack.c.l.b16 %v495
      %v502 = vpack.c.b16 %v501, %v501
      %503 = vrot.lane.b32.xlu0 %v502, 120
      %v504 = vpop.permute.xlu0 %503
      %s506 = scalar_lea.vmem %s347, 4
      %507 = vst.msk [vmem:[%s506] sm:$0xf] %vm496, %v504
      %v509 = vunpack.c.l.b16 %v498
      %v510 = vpack.c.b16 %v509, %v509
      %511 = vrot.lane.b32.xlu0 %v510, 120
      %v512 = vpop.permute.xlu0 %511
      %s514 = scalar_lea.vmem %s355, 4
      %515 = vst.msk [vmem:[%s514] sm:$0xf] %vm496, %v512
      %516 = vrot.lane.b32.xlu0 %v502, 112
      %v517 = vpop.permute.xlu0 %516
      %s519 = scalar_lea.vmem %s347, 8
      %520 = vst.msk [vmem:[%s519] sm:$0xf] %vm496, %v517
      %521 = vrot.lane.b32.xlu0 %v510, 112
      %v522 = vpop.permute.xlu0 %521
      %s524 = scalar_lea.vmem %s355, 8
      %525 = vst.msk [vmem:[%s524] sm:$0xf] %vm496, %v522
      %526 = vrot.lane.b32.xlu0 %v502, 104
      %v527 = vpop.permute.xlu0 %526
      %s529 = scalar_lea.vmem %s347, 12
      %530 = vst.msk [vmem:[%s529] sm:$0xf] %vm496, %v527
      %531 = vrot.lane.b32.xlu0 %v510, 104
      %v532 = vpop.permute.xlu0 %531
      %s534 = scalar_lea.vmem %s355, 12
      %535 = vst.msk [vmem:[%s534] sm:$0xf] %vm496, %v532
      %p536 = scmp.lt.s32.totalorder %s23, 1
      %s537 = scalar_select %p536, %s23, 1
      %p538 = scmp.lt.s32.totalorder %s24, 0
      %s539 = scalar_select %p538, %s24, 0
      %s540 = smul.addr %s537, 4
      %s541 = sadd.s32 %s539, %s540
      %s542 = smul.addr %s541, 4
      %s543 = scalar_lea.vmem %s6, %s542
      %p544 = scmp.lt.s32.totalorder %s23, 1
      %s545 = scalar_select %p544, %s23, 1
      %p546 = scmp.lt.s32.totalorder %s24, 0
      %s547 = scalar_select %p546, %s24, 0
      %s548 = smul.addr %s545, 4
      %s549 = sadd.s32 %s547, %s548
      %s550 = smul.addr %s549, 4
      %s551 = scalar_lea.vmem %s7, %s550
      // Predicated region
      $region45: #{multi_head_attention.2} parent=43 // pred_check
        %p552 = pneg %p191
      $region46: #{multi_head_attention.2} parent=43 // pred_check_branch
        %554 = sbr.rel (%p552) target = $region48
      $region47: #{multi_head_attention.2} parent=43 // pred_region
        _
      $region48: #{multi_head_attention.2} parent=43 // pred_fallthru
        _
      // Predicated region
      $region49: #{multi_head_attention.2} parent=43 // pred_check
        %p555 = pneg %p219
      $region50: #{multi_head_attention.2} parent=43 // pred_check_branch
        %557 = sbr.rel (%p555) target = $region52
      $region51: #{multi_head_attention.2} parent=43 // pred_region
        _
      $region52: #{multi_head_attention.2} parent=43 // pred_fallthru
        _
    $region44: #{multi_head_attention.2} parent=5 // pred_fallthru
      _
    %p558 = scmp.le.s32.totalorder 2, %s14
    // Predicated region
    $region53: #{multi_head_attention.2} parent=5 // pred_check
      %p559 = pneg %p558
    $region54: #{multi_head_attention.2} parent=5 // pred_check_branch
      %561 = sbr.rel (%p559) target = $region56
    $region55: #{multi_head_attention.2} parent=5 // pred_region
      %s562 = ssub.s32 %s14, 2
      // Predicated region
      $region57: #{multi_head_attention.2} parent=55 // pred_check
        %p563 = pneg %p197
      $region58: #{multi_head_attention.2} parent=55 // pred_check_branch
        %565 = sbr.rel (%p563) target = $region60
      $region59: #{multi_head_attention.2} parent=55 // pred_region
        %p566 = scmp.lt.s32.totalorder %s25, 1
        %s567 = scalar_select %p566, %s25, 1
        %p568 = scmp.lt.s32.totalorder %s26, 0
        %s569 = scalar_select %p568, %s26, 0
        %s570 = smul.addr %s567, 4
        %s571 = sadd.s32 %s569, %s570
        %s572 = smul.addr %s571, 4
        %s573 = scalar_lea.vmem %s6, %s572
      $region60: #{multi_head_attention.2} parent=55 // pred_fallthru
        _
      // Predicated region
      $region61: #{multi_head_attention.2} parent=55 // pred_check
        %p574 = pneg %p225
      $region62: #{multi_head_attention.2} parent=55 // pred_check_branch
        %576 = sbr.rel (%p574) target = $region64
      $region63: #{multi_head_attention.2} parent=55 // pred_region
        %p577 = scmp.lt.s32.totalorder %s25, 1
        %s578 = scalar_select %p577, %s25, 1
        %p579 = scmp.lt.s32.totalorder %s26, 0
        %s580 = scalar_select %p579, %s26, 0
        %s581 = smul.addr %s578, 4
        %s582 = sadd.s32 %s580, %s581
        %s583 = smul.addr %s582, 4
        %s584 = scalar_lea.vmem %s7, %s583
      $region64: #{multi_head_attention.2} parent=55 // pred_fallthru
        _
    $region56: #{multi_head_attention.2} parent=5 // pred_fallthru
      _
  $region6: #{multi_head_attention.2} parent=0 // loop_footer
    %s18 = sadd.s32 1, %s14
  $region7: #{multi_head_attention.2} parent=0 // loop_footer_branch
    %13 = sbr.rel target = $region3
  $region8: #{multi_head_attention.2} parent=0 // loop_exit
    _

// kernel: multi_head_attention.3
$region0: #{multi_head_attention.3}
  #allocation0 [shape = 'u32[]', space=smem, size = 0x4, offset = 0x4, fixed_abs, tag = 'smem constant byte address 0x4 - core index']
  #allocation1 [shape = 'u32[144,128]{1,0:T(1,128)}', space=vmem, size = 0x12000, scoped, tag = 'internal scratch']
  #allocation2 [shape = 'f32[4,8,1]{2,1,0:T(8,128)}', space=vmem, size = 0x4000, scoped, tag = 'scratch operand']
  #allocation3 [shape = 'f32[4,8,1]{2,1,0:T(8,128)}', space=vmem, size = 0x4000, scoped, tag = 'scratch operand']
  #allocation4 [shape = 'f32[4,8,8]{2,1,0:T(8,128)}', space=vmem, size = 0x4000, scoped, tag = 'scratch operand']
  %s0 = inlined_call_operand.vmem [shape: bf16[2,4,8,8], index: 0, kind: input, shape index: {}]
  %s1 = inlined_call_operand.vmem [shape: bf16[2,4,8,8], index: 1, kind: input, shape index: {}]
  %s2 = inlined_call_operand.vmem [shape: bf16[4,8,32], index: 2, kind: input, shape index: {}]
  %s3 = inlined_call_operand.vmem [shape: f32[1,32], index: 3, kind: input, shape index: {}]
  %s4 = inlined_call_operand.hbm [shape: f32[2,8,32], index: 4, kind: output, shape index: {}]
  %s5 = sld [smem:[#allocation0]]
  $region57: #{multi_head_attention.3} parent=0
    _
  %s7 = ssub.s32 1, %s5
  %s8 = scalar_select 0, %s7, %s5
  $region1: #{multi_head_attention.3} parent=0
    #allocation5 [shape = 'u8[8192]{0}', space=vmem, size = 0x2000, scoped, tag = 'output window, operand 0']
    #allocation6 [shape = 's32[2]{0}', space=sflag, size = 0x8, scoped, tag = 'scoped memory for multi_head_attention.3']
    %9 = vsyncpa [#allocation6], 0
    %s10 = scalar_lea.sflag [#allocation6], 1
    %11 = vsyncpa %s10, 0
    loop: start=0, step=1, limit=4
    $region2: #{multi_head_attention.3} parent=1 // loop_pre_header
      _
    $region3: #{multi_head_attention.3} parent=1 // loop_header
      %s13 = sphi 0, %s17
      %p14 = scmp.ge.s32.totalorder %s13, 4
      %s20 = sphi 0, %s39
      %s21 = sphi 0, %s35
      %s22 = sphi 0, %s31
      %s23 = sphi 0, %s20
      %s24 = sphi 0, %s21
      %s25 = sphi 0, %s22
      %s26 = sphi 0, %s23
      %s27 = sphi 0, %s24
      %s28 = sphi 0, %s25
      %s44 = sphi 0, %s46
      %s47 = sphi 0, %s44
      %s48 = sphi 0, %s47
      %s64 = sphi 0, %s48
      %s72 = sphi 0, %s74
      %s75 = sphi 0, %s72
      %s76 = sphi 0, %s75
      %s92 = sphi 0, %s76
      %s96 = sphi 0, %s96
      %s98 = sphi 0, %s96
      %s99 = sphi 0, %s98
      %s113 = sphi 0, %s99
      %s117 = sphi 0, %s117
      %s119 = sphi 0, %s117
      %s120 = sphi 0, %s119
      %s134 = sphi 0, %s120
      %s142 = sphi 0, %s144
      %s145 = sphi 0, %s142
      %s146 = sphi 0, %s145
      %s162 = sphi 0, %s146
    $region4: #{multi_head_attention.3} parent=1 // loop_header_branch
      %16 = sbr.rel (%p14) target = $region8
    $region5: #{multi_head_attention.3} parent=1 // loop_body
      %s18 = ssub.s32 %s13, 1
      %s19 = ssub.s32 %s13, 2
      %s29 = sadd.s32 1, %s22
      %p30 = scmp.ge.s32.totalorder %s29, 1
      %s31 = scalar_select %p30, 0, %s29
      %s32 = sadd.s32 1, %s21
      %s33 = scalar_select %p30, %s32, %s21
      %p34 = scmp.ge.s32.totalorder %s33, 1
      %s35 = scalar_select %p34, 0, %s33
      %s36 = sadd.s32 1, %s20
      %s37 = scalar_select %p34, %s36, %s20
      %p38 = scmp.ge.s32.totalorder %s37, 2
      %s39 = scalar_select %p38, 0, %s37
      %s40 = ssub.s32 %s20, %s39
      %s41 = ssub.s32 %s21, %s35
      %s42 = sor.u32 %s40, %s41
      %p43 = scmp.eq.s32.totalorder %s42, 0
      %s45 = sadd.s32 %s44, 1
      %s46 = scalar_select %p43, %s44, %s45
      %p49 = pneg %p43
      %p50 = scmp.eq.s32.totalorder %s13, 1
      %p51 = por %p49, %p50
      %p52 = scmp.ne.s32.totalorder %s44, %s47
      %p53 = scmp.eq.s32.totalorder %s13, 0
      %p54 = por %p52, %p53
      %p55 = scmp.ne.s32.totalorder %s44, %s47
      %p56 = scmp.eq.s32.totalorder %s18, 1
      %p57 = por %p55, %p56
      %p58 = scmp.ne.s32.totalorder %s47, %s48
      %p59 = scmp.eq.s32.totalorder %s18, 0
      %p60 = por %p58, %p59
      %p61 = scmp.ne.s32.totalorder %s47, %s48
      %p62 = scmp.eq.s32.totalorder %s19, 1
      %p63 = por %p61, %p62
      %p65 = scmp.ne.s32.totalorder %s48, %s64
      %p66 = scmp.eq.s32.totalorder %s19, 0
      %p67 = por %p65, %p66
      %s68 = ssub.s32 %s20, %s39
      %s69 = ssub.s32 %s22, %s31
      %s70 = sor.u32 %s68, %s69
      %p71 = scmp.eq.s32.totalorder %s70, 0
      %s73 = sadd.s32 %s72, 1
      %s74 = scalar_select %p71, %s72, %s73
      %p77 = pneg %p71
      %p78 = scmp.eq.s32.totalorder %s13, 1
      %p79 = por %p77, %p78
      %p80 = scmp.ne.s32.totalorder %s72, %s75
      %p81 = scmp.eq.s32.totalorder %s13, 0
      %p82 = por %p80, %p81
      %p83 = scmp.ne.s32.totalorder %s72, %s75
      %p84 = scmp.eq.s32.totalorder %s18, 1
      %p85 = por %p83, %p84
      %p86 = scmp.ne.s32.totalorder %s75, %s76
      %p87 = scmp.eq.s32.totalorder %s18, 0
      %p88 = por %p86, %p87
      %p89 = scmp.ne.s32.totalorder %s75, %s76
      %p90 = scmp.eq.s32.totalorder %s19, 1
      %p91 = por %p89, %p90
      %p93 = scmp.ne.s32.totalorder %s76, %s92
      %p94 = scmp.eq.s32.totalorder %s19, 0
      %p95 = por %p93, %p94
      %s97 = sadd.s32 %s96, 1
      %p100 = scmp.eq.s32.totalorder %s13, 1
      %p101 = scmp.ne.s32.totalorder %s96, %s98
      %p102 = scmp.eq.s32.totalorder %s13, 0
      %p103 = por %p101, %p102
      %p104 = scmp.ne.s32.totalorder %s96, %s98
      %p105 = scmp.eq.s32.totalorder %s18, 1
      %p106 = por %p104, %p105
      %p107 = scmp.ne.s32.totalorder %s98, %s99
      %p108 = scmp.eq.s32.totalorder %s18, 0
      %p109 = por %p107, %p108
      %p110 = scmp.ne.s32.totalorder %s98, %s99
      %p111 = scmp.eq.s32.totalorder %s19, 1
      %p112 = por %p110, %p111
      %p114 = scmp.ne.s32.totalorder %s99, %s113
      %p115 = scmp.eq.s32.totalorder %s19, 0
      %p116 = por %p114, %p115
      %s118 = sadd.s32 %s117, 1
      %p121 = scmp.eq.s32.totalorder %s13, 1
      %p122 = scmp.ne.s32.totalorder %s117, %s119
      %p123 = scmp.eq.s32.totalorder %s13, 0
      %p124 = por %p122, %p123
      %p125 = scmp.ne.s32.totalorder %s117, %s119
      %p126 = scmp.eq.s32.totalorder %s18, 1
      %p127 = por %p125, %p126
      %p128 = scmp.ne.s32.totalorder %s119, %s120
      %p129 = scmp.eq.s32.totalorder %s18, 0
      %p130 = por %p128, %p129
      %p131 = scmp.ne.s32.totalorder %s119, %s120
      %p132 = scmp.eq.s32.totalorder %s19, 1
      %p133 = por %p131, %p132
      %p135 = scmp.ne.s32.totalorder %s120, %s134
      %p136 = scmp.eq.s32.totalorder %s19, 0
      %p137 = por %p135, %p136
      %s138 = ssub.s32 %s20, %s39
      %s139 = ssub.s32 %s21, %s35
      %s140 = sor.u32 %s138, %s139
      %p141 = scmp.eq.s32.totalorder %s140, 0
      %s143 = sadd.s32 %s142, 1
      %s144 = scalar_select %p141, %s142, %s143
      %p147 = pneg %p141
      %p148 = scmp.eq.s32.totalorder %s13, 1
      %p149 = por %p147, %p148
      %p150 = scmp.ne.s32.totalorder %s142, %s145
      %p151 = scmp.eq.s32.totalorder %s13, 0
      %p152 = por %p150, %p151
      %p153 = scmp.ne.s32.totalorder %s142, %s145
      %p154 = scmp.eq.s32.totalorder %s18, 1
      %p155 = por %p153, %p154
      %p156 = scmp.ne.s32.totalorder %s145, %s146
      %p157 = scmp.eq.s32.totalorder %s18, 0
      %p158 = por %p156, %p157
      %p159 = scmp.ne.s32.totalorder %s145, %s146
      %p160 = scmp.eq.s32.totalorder %s19, 1
      %p161 = por %p159, %p160
      %p163 = scmp.ne.s32.totalorder %s146, %s162
      %p164 = scmp.eq.s32.totalorder %s19, 0
      %p165 = por %p163, %p164
      %p166 = scmp.le.s32.totalorder 1, %s13
      %p167 = scmp.lt.s32.totalorder %s13, 3
      %p168 = pnand %p166, %p167
      %p169 = pneg %p168
      // Predicated region
      $region9: #{multi_head_attention.3} parent=5 // pred_check
        _
      $region10: #{multi_head_attention.3} parent=5 // pred_check_branch
        %171 = sbr.rel (%p168) target = $region12
      $region11: #{multi_head_attention.3} parent=5 // pred_region
        %s172 = ssub.s32 %s13, 1
        // Predicated region
        $region13: #{multi_head_attention.3} parent=11 // pred_check
          %p173 = pneg %p109
        $region14: #{multi_head_attention.3} parent=11 // pred_check_branch
          %175 = sbr.rel (%p173) target = $region16
        $region15: #{multi_head_attention.3} parent=11 // pred_region
          _
        $region16: #{multi_head_attention.3} parent=11 // pred_fallthru
          _
        // Predicated region
        $region17: #{multi_head_attention.3} parent=11 // pred_check
          %p176 = pneg %p130
        $region18: #{multi_head_attention.3} parent=11 // pred_check_branch
          %178 = sbr.rel (%p176) target = $region20
        $region19: #{multi_head_attention.3} parent=11 // pred_region
          _
        $region20: #{multi_head_attention.3} parent=11 // pred_fallthru
          _
      $region12: #{multi_head_attention.3} parent=5 // pred_fallthru
        _
      %p179 = scmp.lt.s32.totalorder %s13, 2
      // Predicated region
      $region21: #{multi_head_attention.3} parent=5 // pred_check
        %p180 = pneg %p179
      $region22: #{multi_head_attention.3} parent=5 // pred_check_branch
        %182 = sbr.rel (%p180) target = $region24
      $region23: #{multi_head_attention.3} parent=5 // pred_region
        // Predicated region
        $region25: #{multi_head_attention.3} parent=23 // pred_check
          %p183 = pneg %p54
        $region26: #{multi_head_attention.3} parent=23 // pred_check_branch
          %185 = sbr.rel (%p183) target = $region28
        $region27: #{multi_head_attention.3} parent=23 // pred_region
          %p186 = scmp.lt.s32.totalorder %s20, 1
          %s187 = scalar_select %p186, %s20, 1
          %p188 = scmp.lt.s32.totalorder %s21, 0
          %s189 = scalar_select %p188, %s21, 0
          %s190 = smul.addr %s187, 4
          %s191 = sadd.s32 %s189, %s190
          %s192 = smul.addr %s191, 4
          %s193 = scalar_lea.vmem %s0, %s192
        $region28: #{multi_head_attention.3} parent=23 // pred_fallthru
          _
        // Predicated region
        $region29: #{multi_head_attention.3} parent=23 // pred_check
          %p194 = pneg %p82
        $region30: #{multi_head_attention.3} parent=23 // pred_check_branch
          %196 = sbr.rel (%p194) target = $region32
        $region31: #{multi_head_attention.3} parent=23 // pred_region
          %p197 = scmp.lt.s32.totalorder %s20, 1
          %s198 = scalar_select %p197, %s20, 1
          %p199 = scmp.lt.s32.totalorder %s22, 0
          %s200 = scalar_select %p199, %s22, 0
          %s201 = smul.addr %s198, 4
          %s202 = sadd.s32 %s200, %s201
          %s203 = smul.addr %s202, 4
          %s204 = scalar_lea.vmem %s1, %s203
        $region32: #{multi_head_attention.3} parent=23 // pred_fallthru
          _
      $region24: #{multi_head_attention.3} parent=5 // pred_fallthru
        _
      %p205 = scmp.le.s32.totalorder 1, %s13
      %p206 = scmp.lt.s32.totalorder %s13, 3
      %p207 = pnand %p205, %p206
      %p208 = pneg %p207
      // Predicated region
      $region33: #{multi_head_attention.3} parent=5 // pred_check
        _
      $region34: #{multi_head_attention.3} parent=5 // pred_check_branch
        %210 = sbr.rel (%p207) target = $region36
      $region35: #{multi_head_attention.3} parent=5 // pred_region
        %s211 = ssub.s32 %s13, 1
        %p212 = scmp.lt.s32.totalorder %s23, 1
        %s213 = scalar_select %p212, %s23, 1
        %p214 = scmp.lt.s32.totalorder %s24, 0
        %s215 = scalar_select %p214, %s24, 0
        %s216 = smul.addr %s213, 4
        %s217 = sadd.s32 %s215, %s216
        %s218 = smul.addr %s217, 4
        %s219 = scalar_lea.vmem %s0, %s218
        %p220 = pneg %p60
        %p221 = pneg %p57
        %p222 = scmp.lt.s32.totalorder %s23, 1
        %s223 = scalar_select %p222, %s23, 1
        %p224 = scmp.lt.s32.totalorder %s25, 0
        %s225 = scalar_select %p224, %s25, 0
        %s226 = smul.addr %s223, 4
        %s227 = sadd.s32 %s225, %s226
        %s228 = smul.addr %s227, 4
        %s229 = scalar_lea.vmem %s1, %s228
        %p230 = pneg %p88
        %p231 = pneg %p85
        %p232 = pneg %p109
        %p233 = pneg %p106
        %p234 = pneg %p130
        %p235 = pneg %p127
        %p236 = pneg %p158
        %p237 = pneg %p155
        %s238 = sand.u32 %s145, 1
        %s239 = scalar_lea.sflag [#allocation6], %s238
        %s240 = sand.u32 %s145, 1
        %s241 = smul.addr %s240, 8
        %s242 = scalar_lea.vmem [#allocation5], %s241
        %p243 = scmp.lt.s32.totalorder %s23, 1
        %s244 = scalar_select %p243, %s23, 1
        %p245 = scmp.lt.s32.totalorder %s24, 0
        %s246 = scalar_select %p245, %s24, 0
        %s247 = smul.addr %s244, 4
        %s248 = sadd.s32 %s246, %s247
        %s249 = smul.addr %s248, 4
        %s250 = scalar_lea.vmem %s0, %s249
        %p251 = scmp.lt.s32.totalorder %s23, 1
        %s252 = scalar_select %p251, %s23, 1
        %p253 = scmp.lt.s32.totalorder %s25, 0
        %s254 = scalar_select %p253, %s25, 0
        %s255 = smul.addr %s252, 4
        %s256 = sadd.s32 %s254, %s255
        %s257 = smul.addr %s256, 4
        %s258 = scalar_lea.vmem %s1, %s257
        %p260 = scmp.eq.s32.totalorder %s25, 0
        // Predicated region
        $region37: #{multi_head_attention.3} parent=35 // pred_check
          %p261 = pneg %p260
        $region38: #{multi_head_attention.3} parent=35 // pred_check_branch
          %263 = sbr.rel (%p261) target = $region40
        $region39: #{multi_head_attention.3} parent=35 // pred_region
          %vm264 = vcmask 7168
          %265 = vst.msk [vmem:[#allocation2] sm:$0xff] %vm264, -inf
          %266 = vst.msk [vmem:[#allocation2 + $0x8] sm:$0xff] %vm264, -inf
          %267 = vst.msk [vmem:[#allocation2 + $0x10] sm:$0xff] %vm264, -inf
          %268 = vst.msk [vmem:[#allocation2 + $0x18] sm:$0xff] %vm264, -inf
          %269 = vst.msk [vmem:[#allocation3] sm:$0xff] %vm264, 0.0
          %270 = vst.msk [vmem:[#allocation3 + $0x8] sm:$0xff] %vm264, 0.0
          %271 = vst.msk [vmem:[#allocation3 + $0x10] sm:$0xff] %vm264, 0.0
          %272 = vst.msk [vmem:[#allocation3 + $0x18] sm:$0xff] %vm264, 0.0
          %vm273 = vcmask 64512
          %274 = vst.msk [vmem:[#allocation4] sm:$0xff] %vm273, 0.0
          %275 = vst.msk [vmem:[#allocation4 + $0x8] sm:$0xff] %vm273, 0.0
          %276 = vst.msk [vmem:[#allocation4 + $0x10] sm:$0xff] %vm273, 0.0
          %277 = vst.msk [vmem:[#allocation4 + $0x18] sm:$0xff] %vm273, 0.0
        $region40: #{multi_head_attention.3} parent=35 // pred_fallthru
          _
        %v278 = vld [vmem:[%s250] sm:$0xf]
        %v279 = vld [vmem:[%s250 + $0x4] sm:$0xf]
        %v280 = vld [vmem:[%s250 + $0x8] sm:$0xf]
        %v281 = vld [vmem:[%s250 + $0xc] sm:$0xf]
        %v282 = vld [vmem:[%s258] sm:$0xf]
        %v283 = vld [vmem:[%s258 + $0x4] sm:$0xf]
        %v284 = vld [vmem:[%s258 + $0x8] sm:$0xf]
        %v285 = vld [vmem:[%s258 + $0xc] sm:$0xf]
        %vm286 = vcmask 64512
        %v288 = vsel %vm286, %v278, 0
        %v291 = vsel %vm286, %v282, 0
        %293 = vmatprep.subr.bf16.mxu0 0
        %294 = vmatpush1.bf16.xpose.msra.mxu0 0
        %295 = vmatprep.subr.bf16.mxu0 0
        %296 = vmatpush1.bf16.xpose.msra.mxu0 0
        %297 = vmatprep.subr.bf16.mxu0 0
        %298 = vmatpush1.bf16.xpose.msra.mxu0 0
        %299 = vmatprep.subr.bf16.mxu0 0
        %300 = vmatpush1.bf16.xpose.msra.mxu0 0
        %301 = vmatprep.subr.bf16.mxu0 0
        %302 = vmatpush1.bf16.xpose.msra.mxu0 0
        %303 = vmatprep.subr.bf16.mxu0 0
        %304 = vmatpush1.bf16.xpose.msra.mxu0 0
        %305 = vmatprep.subr.bf16.mxu0 0
        %306 = vmatpush1.bf16.xpose.msra.mxu0 0
        %307 = vmatprep.subr.bf16.mxu0 0
        %308 = vmatpush1.bf16.xpose.msra.mxu0 %v291
        %309 = vmatprep.subr.bf16.mxu0 0
        %310 = vmatpush2.bf16.xpose.msra.mxu0 0
        %311 = vmatprep.subr.bf16.mxu0 0
        %312 = vmatpush2.bf16.xpose.msra.mxu0 0
        %313 = vmatprep.subr.bf16.mxu0 0
        %314 = vmatpush2.bf16.xpose.msra.mxu0 0
        %315 = vmatprep.subr.bf16.mxu0 0
        %316 = vmatpush2.bf16.xpose.msra.mxu0 0
        %317 = vmatprep.subr.bf16.mxu0 0
        %318 = vmatpush2.bf16.xpose.msra.mxu0 0
        %319 = vmatprep.subr.bf16.mxu0 0
        %320 = vmatpush2.bf16.xpose.msra.mxu0 0
        %321 = vmatprep.subr.bf16.mxu0 0
        %322 = vmatpush2.bf16.xpose.msra.mxu0 0
        %323 = vmatprep.subr.bf16.mxu0 0
        %324 = vmatpush2.bf16.xpose.msra.mxu0 0
        %325 = vmatprep.mubr.bf16.mxu0 0
        %326 = vmatmul.mubr.bf16.gmra.mxu0 %v288
        %v327 = vpop.f32.mrf.mxu0
        %v328 = vadd.f32 0.0, %v327
        %v329 = vpop.f32.mrf.mxu0
        %v330 = vpop.f32.mrf.mxu0
        %v331 = vpop.f32.mrf.mxu0
        %332 = vdwg.mxu0
        %v334 = vsel %vm286, %v279, 0
        %v337 = vsel %vm286, %v283, 0
        %339 = vmatprep.subr.bf16.mxu0 0
        %340 = vmatpush1.bf16.xpose.msra.mxu0 0
        %341 = vmatprep.subr.bf16.mxu0 0
        %342 = vmatpush1.bf16.xpose.msra.mxu0 0
        %343 = vmatprep.subr.bf16.mxu0 0
        %344 = vmatpush1.bf16.xpose.msra.mxu0 0
        %345 = vmatprep.subr.bf16.mxu0 0
        %346 = vmatpush1.bf16.xpose.msra.mxu0 0
        %347 = vmatprep.subr.bf16.mxu0 0
        %348 = vmatpush1.bf16.xpose.msra.mxu0 0
        %349 = vmatprep.subr.bf16.mxu0 0
        %350 = vmatpush1.bf16.xpose.msra.mxu0 0
        %351 = vmatprep.subr.bf16.mxu0 0
        %352 = vmatpush1.bf16.xpose.msra.mxu0 0
        %353 = vmatprep.subr.bf16.mxu0 0
        %354 = vmatpush1.bf16.xpose.msra.mxu0 %v337
        %355 = vmatprep.subr.bf16.mxu0 0
        %356 = vmatpush2.bf16.xpose.msra.mxu0 0
        %357 = vmatprep.subr.bf16.mxu0 0
        %358 = vmatpush2.bf16.xpose.msra.mxu0 0
        %359 = vmatprep.subr.bf16.mxu0 0
        %360 = vmatpush2.bf16.xpose.msra.mxu0 0
        %361 = vmatprep.subr.bf16.mxu0 0
        %362 = vmatpush2.bf16.xpose.msra.mxu0 0
        %363 = vmatprep.subr.bf16.mxu0 0
        %364 = vmatpush2.bf16.xpose.msra.mxu0 0
        %365 = vmatprep.subr.bf16.mxu0 0
        %366 = vmatpush2.bf16.xpose.msra.mxu0 0
        %367 = vmatprep.subr.bf16.mxu0 0
        %368 = vmatpush2.bf16.xpose.msra.mxu0 0
        %369 = vmatprep.subr.bf16.mxu0 0
        %370 = vmatpush2.bf16.xpose.msra.mxu0 0
        %371 = vmatprep.mubr.bf16.mxu0 0
        %372 = vmatmul.mubr.bf16.gmra.mxu0 %v334
        %v373 = vpop.f32.mrf.mxu0
        %v374 = vadd.f32 0.0, %v373
        %v375 = vpop.f32.mrf.mxu0
        %v376 = vpop.f32.mrf.mxu0
        %v377 = vpop.f32.mrf.mxu0
        %378 = vdwg.mxu0
        %v380 = vsel %vm286, %v280, 0
        %v383 = vsel %vm286, %v284, 0
        %385 = vmatprep.subr.bf16.mxu0 0
        %386 = vmatpush1.bf16.xpose.msra.mxu0 0
        %387 = vmatprep.subr.bf16.mxu0 0
        %388 = vmatpush1.bf16.xpose.msra.mxu0 0
        %389 = vmatprep.subr.bf16.mxu0 0
        %390 = vmatpush1.bf16.xpose.msra.mxu0 0
        %391 = vmatprep.subr.bf16.mxu0 0
        %392 = vmatpush1.bf16.xpose.msra.mxu0 0
        %393 = vmatprep.subr.bf16.mxu0 0
        %394 = vmatpush1.bf16.xpose.msra.mxu0 0
        %395 = vmatprep.subr.bf16.mxu0 0
        %396 = vmatpush1.bf16.xpose.msra.mxu0 0
        %397 = vmatprep.subr.bf16.mxu0 0
        %398 = vmatpush1.bf16.xpose.msra.mxu0 0
        %399 = vmatprep.subr.bf16.mxu0 0
        %400 = vmatpush1.bf16.xpose.msra.mxu0 %v383
        %401 = vmatprep.subr.bf16.mxu0 0
        %402 = vmatpush2.bf16.xpose.msra.mxu0 0
        %403 = vmatprep.subr.bf16.mxu0 0
        %404 = vmatpush2.bf16.xpose.msra.mxu0 0
        %405 = vmatprep.subr.bf16.mxu0 0
        %406 = vmatpush2.bf16.xpose.msra.mxu0 0
        %407 = vmatprep.subr.bf16.mxu0 0
        %408 = vmatpush2.bf16.xpose.msra.mxu0 0
        %409 = vmatprep.subr.bf16.mxu0 0
        %410 = vmatpush2.bf16.xpose.msra.mxu0 0
        %411 = vmatprep.subr.bf16.mxu0 0
        %412 = vmatpush2.bf16.xpose.msra.mxu0 0
        %413 = vmatprep.subr.bf16.mxu0 0
        %414 = vmatpush2.bf16.xpose.msra.mxu0 0
        %415 = vmatprep.subr.bf16.mxu0 0
        %416 = vmatpush2.bf16.xpose.msra.mxu0 0
        %417 = vmatprep.mubr.bf16.mxu0 0
        %418 = vmatmul.mubr.bf16.gmra.mxu0 %v380
        %v419 = vpop.f32.mrf.mxu0
        %v420 = vadd.f32 0.0, %v419
        %v421 = vpop.f32.mrf.mxu0
        %v422 = vpop.f32.mrf.mxu0
        %v423 = vpop.f32.mrf.mxu0
        %424 = vdwg.mxu0
        %v426 = vsel %vm286, %v281, 0
        %v429 = vsel %vm286, %v285, 0
        %431 = vmatprep.subr.bf16.mxu0 0
        %432 = vmatpush1.bf16.xpose.msra.mxu0 0
        %433 = vmatprep.subr.bf16.mxu0 0
        %434 = vmatpush1.bf16.xpose.msra.mxu0 0
        %435 = vmatprep.subr.bf16.mxu0 0
        %436 = vmatpush1.bf16.xpose.msra.mxu0 0
        %437 = vmatprep.subr.bf16.mxu0 0
        %438 = vmatpush1.bf16.xpose.msra.mxu0 0
        %439 = vmatprep.subr.bf16.mxu0 0
        %440 = vmatpush1.bf16.xpose.msra.mxu0 0
        %441 = vmatprep.subr.bf16.mxu0 0
        %442 = vmatpush1.bf16.xpose.msra.mxu0 0
        %443 = vmatprep.subr.bf16.mxu0 0
        %444 = vmatpush1.bf16.xpose.msra.mxu0 0
        %445 = vmatprep.subr.bf16.mxu0 0
        %446 = vmatpush1.bf16.xpose.msra.mxu0 %v429
        %447 = vmatprep.subr.bf16.mxu0 0
        %448 = vmatpush2.bf16.xpose.msra.mxu0 0
        %449 = vmatprep.subr.bf16.mxu0 0
        %450 = vmatpush2.bf16.xpose.msra.mxu0 0
        %451 = vmatprep.subr.bf16.mxu0 0
        %452 = vmatpush2.bf16.xpose.msra.mxu0 0
        %453 = vmatprep.subr.bf16.mxu0 0
        %454 = vmatpush2.bf16.xpose.msra.mxu0 0
        %455 = vmatprep.subr.bf16.mxu0 0
        %456 = vmatpush2.bf16.xpose.msra.mxu0 0
        %457 = vmatprep.subr.bf16.mxu0 0
        %458 = vmatpush2.bf16.xpose.msra.mxu0 0
        %459 = vmatprep.subr.bf16.mxu0 0
        %460 = vmatpush2.bf16.xpose.msra.mxu0 0
        %461 = vmatprep.subr.bf16.mxu0 0
        %462 = vmatpush2.bf16.xpose.msra.mxu0 0
        %463 = vmatprep.mubr.bf16.mxu0 0
        %464 = vmatmul.mubr.bf16.gmra.mxu0 %v426
        %v465 = vpop.f32.mrf.mxu0
        %v466 = vadd.f32 0.0, %v465
        %v467 = vpop.f32.mrf.mxu0
        %v468 = vpop.f32.mrf.mxu0
        %v469 = vpop.f32.mrf.mxu0
        %470 = vdwg.mxu0
        %v471 = vld [vmem:[#allocation2] sm:$0xff]
        %v472 = vld [vmem:[#allocation2 + $0x8] sm:$0xff]
        %v473 = vld [vmem:[#allocation2 + $0x10] sm:$0xff]
        %v474 = vld [vmem:[#allocation2 + $0x18] sm:$0xff]
        %v475 = vsel %vm286, %v328, -inf
        %476 = vmax.xlane.f32.xlu0 %v475
        %v477 = vpop.xlane.xlu0 %476
        %v478 = vsel %vm286, %v374, -inf
        %479 = vmax.xlane.f32.xlu0 %v478
        %v480 = vpop.xlane.xlu0 %479
        %v481 = vsel %vm286, %v420, -inf
        %482 = vmax.xlane.f32.xlu0 %v481
        %v483 = vpop.xlane.xlu0 %482
        %v484 = vsel %vm286, %v466, -inf
        %485 = vmax.xlane.f32.xlu0 %v484
        %v486 = vpop.xlane.xlu0 %485
        %v487 = vmax.f32 %v471, %v477
        %v488 = vmax.f32 %v472, %v480
        %v489 = vmax.f32 %v473, %v483
        %v490 = vmax.f32 %v474, %v486
        %v491 = vsub.f32 %v471, %v487
        %v492 = vsub.f32 %v472, %v488
        %v493 = vsub.f32 %v473, %v489
        %v494 = vsub.f32 %v474, %v490
        %v495 = vmul.f32 %v491, 1.442695
        %v496 = vpow.pop %v495
        %v497 = vmul.f32 %v492, 1.442695
        %v498 = vpow.pop %v497
        %v499 = vmul.f32 %v493, 1.442695
        %v500 = vpow.pop %v499
        %v501 = vmul.f32 %v494, 1.442695
        %v502 = vpow.pop %v501
        %504 = vset.pattern.permute.xlu0 0
        %505 = vperm.xlu0 %504, %v487
        %v506 = vpop.permute.xlu0 %505
        %509 = vset.pattern.permute.xlu0 0
        %510 = vperm.xlu0 %509, %v488
        %v511 = vpop.permute.xlu0 %510
        %514 = vset.pattern.permute.xlu0 0
        %515 = vperm.xlu0 %514, %v489
        %v516 = vpop.permute.xlu0 %515
        %519 = vset.pattern.permute.xlu0 0
        %520 = vperm.xlu0 %519, %v490
        %v521 = vpop.permute.xlu0 %520
        %v523 = vsub.f32 %v328, %v506
        %v524 = vsub.f32 %v374, %v511
        %v525 = vsub.f32 %v420, %v516
        %v526 = vsub.f32 %v466, %v521
        %v527 = vmul.f32 %v523, 1.442695
        %v528 = vpow.pop %v527
        %v529 = vmul.f32 %v524, 1.442695
        %v530 = vpow.pop %v529
        %v531 = vmul.f32 %v525, 1.442695
        %v532 = vpow.pop %v531
        %v533 = vmul.f32 %v526, 1.442695
        %v534 = vpow.pop %v533
        %v535 = vld [vmem:[#allocation3] sm:$0xff]
        %v536 = vld [vmem:[#allocation3 + $0x8] sm:$0xff]
        %v537 = vld [vmem:[#allocation3 + $0x10] sm:$0xff]
        %v538 = vld [vmem:[#allocation3 + $0x18] sm:$0xff]
        %v539 = vmul.f32 %v496, %v535
        %v540 = vmul.f32 %v498, %v536
        %v541 = vmul.f32 %v500, %v537
        %v542 = vmul.f32 %v502, %v538
        %v543 = vsel %vm286, %v528, 0.0
        %544 = vadd.xlane.f32.xlu0 %v543
        %v545 = vpop.xlane.xlu0 %544
        %v546 = vsel %vm286, %v530, 0.0
        %547 = vadd.xlane.f32.xlu0 %v546
        %v548 = vpop.xlane.xlu0 %547
        %v549 = vsel %vm286, %v532, 0.0
        %550 = vadd.xlane.f32.xlu0 %v549
        %v551 = vpop.xlane.xlu0 %550
        %v552 = vsel %vm286, %v534, 0.0
        %553 = vadd.xlane.f32.xlu0 %v552
        %v554 = vpop.xlane.xlu0 %553
        %v555 = vadd.f32 %v539, %v545
        %v556 = vadd.f32 %v540, %v548
        %v557 = vadd.f32 %v541, %v551
        %v558 = vadd.f32 %v542, %v554
        %vm559 = vcmask 7168
        %560 = vst.msk [vmem:[#allocation3] sm:$0xff] %vm559, %v555
        %561 = vst.msk [vmem:[#allocation3 + $0x8] sm:$0xff] %vm559, %v556
        %562 = vst.msk [vmem:[#allocation3 + $0x10] sm:$0xff] %vm559, %v557
        %563 = vst.msk [vmem:[#allocation3 + $0x18] sm:$0xff] %vm559, %v558
        %v564 = vld [vmem:[#allocation4] sm:$0xff]
        %v565 = vld [vmem:[#allocation4 + $0x8] sm:$0xff]
        %v566 = vld [vmem:[#allocation4 + $0x10] sm:$0xff]
        %v567 = vld [vmem:[#allocation4 + $0x18] sm:$0xff]
        %569 = vset.pattern.permute.xlu0 0
        %570 = vperm.xlu0 %569, %v496
        %v571 = vpop.permute.xlu0 %570
        %574 = vset.pattern.permute.xlu0 0
        %575 = vperm.xlu0 %574, %v498
        %v576 = vpop.permute.xlu0 %575
        %579 = vset.pattern.permute.xlu0 0
        %580 = vperm.xlu0 %579, %v500
        %v581 = vpop.permute.xlu0 %580
        %584 = vset.pattern.permute.xlu0 0
        %585 = vperm.xlu0 %584, %v502
        %v586 = vpop.permute.xlu0 %585
        %v588 = vmul.f32 %v571, %v564
        %v589 = vmul.f32 %v576, %v565
        %v590 = vmul.f32 %v581, %v566
        %v591 = vmul.f32 %v586, %v567
        %v592 = vpack.c.bf16 %v528, %v528
        %v593 = vpack.c.bf16 %v530, %v530
        %v594 = vpack.c.bf16 %v532, %v532
        %v595 = vpack.c.bf16 %v534, %v534
        %v597 = vsel %vm286, %v592, 0
        %vm599 = vcmask 1043456
        %v600 = vsel %vm599, %v282, 0
        %602 = vmatprep.subr.bf16.mxu0 0
        %603 = vmatpush1.bf16.msra.mxu0 0
        %604 = vmatprep.subr.bf16.mxu0 0
        %605 = vmatpush1.bf16.msra.mxu0 0
        %606 = vmatprep.subr.bf16.mxu0 0
        %607 = vmatpush1.bf16.msra.mxu0 0
        %608 = vmatprep.subr.bf16.mxu0 0
        %609 = vmatpush1.bf16.msra.mxu0 0
        %610 = vmatprep.subr.bf16.mxu0 0
        %611 = vmatpush1.bf16.msra.mxu0 0
        %612 = vmatprep.subr.bf16.mxu0 0
        %613 = vmatpush1.bf16.msra.mxu0 0
        %614 = vmatprep.subr.bf16.mxu0 0
        %615 = vmatpush1.bf16.msra.mxu0 0
        %616 = vmatprep.subr.bf16.mxu0 0
        %617 = vmatpush1.bf16.msra.mxu0 %v600
        %618 = vmatprep.subr.bf16.mxu0 0
        %619 = vmatpush2.bf16.msra.mxu0 0
        %620 = vmatprep.subr.bf16.mxu0 0
        %621 = vmatpush2.bf16.msra.mxu0 0
        %622 = vmatprep.subr.bf16.mxu0 0
        %623 = vmatpush2.bf16.msra.mxu0 0
        %624 = vmatprep.subr.bf16.mxu0 0
        %625 = vmatpush2.bf16.msra.mxu0 0
        %626 = vmatprep.subr.bf16.mxu0 0
        %627 = vmatpush2.bf16.msra.mxu0 0
        %628 = vmatprep.subr.bf16.mxu0 0
        %629 = vmatpush2.bf16.msra.mxu0 0
        %630 = vmatprep.subr.bf16.mxu0 0
        %631 = vmatpush2.bf16.msra.mxu0 0
        %632 = vmatprep.subr.bf16.mxu0 0
        %633 = vmatpush2.bf16.msra.mxu0 0
        %634 = vmatprep.mubr.bf16.mxu0 0
        %635 = vmatmul.mubr.bf16.gmra.mxu0 %v597
        %v636 = vpop.f32.mrf.mxu0
        %v637 = vadd.f32 0.0, %v636
        %v638 = vpop.f32.mrf.mxu0
        %v639 = vpop.f32.mrf.mxu0
        %v640 = vpop.f32.mrf.mxu0
        %641 = vdwg.mxu0
        %v643 = vsel %vm286, %v593, 0
        %v645 = vsel %vm599, %v283, 0
        %647 = vmatprep.subr.bf16.mxu0 0
        %648 = vmatpush1.bf16.msra.mxu0 0
        %649 = vmatprep.subr.bf16.mxu0 0
        %650 = vmatpush1.bf16.msra.mxu0 0
        %651 = vmatprep.subr.bf16.mxu0 0
        %652 = vmatpush1.bf16.msra.mxu0 0
        %653 = vmatprep.subr.bf16.mxu0 0
        %654 = vmatpush1.bf16.msra.mxu0 0
        %655 = vmatprep.subr.bf16.mxu0 0
        %656 = vmatpush1.bf16.msra.mxu0 0
        %657 = vmatprep.subr.bf16.mxu0 0
        %658 = vmatpush1.bf16.msra.mxu0 0
        %659 = vmatprep.subr.bf16.mxu0 0
        %660 = vmatpush1.bf16.msra.mxu0 0
        %661 = vmatprep.subr.bf16.mxu0 0
        %662 = vmatpush1.bf16.msra.mxu0 %v645
        %663 = vmatprep.subr.bf16.mxu0 0
        %664 = vmatpush2.bf16.msra.mxu0 0
        %665 = vmatprep.subr.bf16.mxu0 0
        %666 = vmatpush2.bf16.msra.mxu0 0
        %667 = vmatprep.subr.bf16.mxu0 0
        %668 = vmatpush2.bf16.msra.mxu0 0
        %669 = vmatprep.subr.bf16.mxu0 0
        %670 = vmatpush2.bf16.msra.mxu0 0
        %671 = vmatprep.subr.bf16.mxu0 0
        %672 = vmatpush2.bf16.msra.mxu0 0
        %673 = vmatprep.subr.bf16.mxu0 0
        %674 = vmatpush2.bf16.msra.mxu0 0
        %675 = vmatprep.subr.bf16.mxu0 0
        %676 = vmatpush2.bf16.msra.mxu0 0
        %677 = vmatprep.subr.bf16.mxu0 0
        %678 = vmatpush2.bf16.msra.mxu0 0
        %679 = vmatprep.mubr.bf16.mxu0 0
        %680 = vmatmul.mubr.bf16.gmra.mxu0 %v643
        %v681 = vpop.f32.mrf.mxu0
        %v682 = vadd.f32 0.0, %v681
        %v683 = vpop.f32.mrf.mxu0
        %v684 = vpop.f32.mrf.mxu0
        %v685 = vpop.f32.mrf.mxu0
        %686 = vdwg.mxu0
        %v688 = vsel %vm286, %v594, 0
        %v690 = vsel %vm599, %v284, 0
        %692 = vmatprep.subr.bf16.mxu0 0
        %693 = vmatpush1.bf16.msra.mxu0 0
        %694 = vmatprep.subr.bf16.mxu0 0
        %695 = vmatpush1.bf16.msra.mxu0 0
        %696 = vmatprep.subr.bf16.mxu0 0
        %697 = vmatpush1.bf16.msra.mxu0 0
        %698 = vmatprep.subr.bf16.mxu0 0
        %699 = vmatpush1.bf16.msra.mxu0 0
        %700 = vmatprep.subr.bf16.mxu0 0
        %701 = vmatpush1.bf16.msra.mxu0 0
        %702 = vmatprep.subr.bf16.mxu0 0
        %703 = vmatpush1.bf16.msra.mxu0 0
        %704 = vmatprep.subr.bf16.mxu0 0
        %705 = vmatpush1.bf16.msra.mxu0 0
        %706 = vmatprep.subr.bf16.mxu0 0
        %707 = vmatpush1.bf16.msra.mxu0 %v690
        %708 = vmatprep.subr.bf16.mxu0 0
        %709 = vmatpush2.bf16.msra.mxu0 0
        %710 = vmatprep.subr.bf16.mxu0 0
        %711 = vmatpush2.bf16.msra.mxu0 0
        %712 = vmatprep.subr.bf16.mxu0 0
        %713 = vmatpush2.bf16.msra.mxu0 0
        %714 = vmatprep.subr.bf16.mxu0 0
        %715 = vmatpush2.bf16.msra.mxu0 0
        %716 = vmatprep.subr.bf16.mxu0 0
        %717 = vmatpush2.bf16.msra.mxu0 0
        %718 = vmatprep.subr.bf16.mxu0 0
        %719 = vmatpush2.bf16.msra.mxu0 0
        %720 = vmatprep.subr.bf16.mxu0 0
        %721 = vmatpush2.bf16.msra.mxu0 0
        %722 = vmatprep.subr.bf16.mxu0 0
        %723 = vmatpush2.bf16.msra.mxu0 0
        %724 = vmatprep.mubr.bf16.mxu0 0
        %725 = vmatmul.mubr.bf16.gmra.mxu0 %v688
        %v726 = vpop.f32.mrf.mxu0
        %v727 = vadd.f32 0.0, %v726
        %v728 = vpop.f32.mrf.mxu0
        %v729 = vpop.f32.mrf.mxu0
        %v730 = vpop.f32.mrf.mxu0
        %731 = vdwg.mxu0
        %v733 = vsel %vm286, %v595, 0
        %v735 = vsel %vm599, %v285, 0
        %737 = vmatprep.subr.bf16.mxu0 0
        %738 = vmatpush1.bf16.msra.mxu0 0
        %739 = vmatprep.subr.bf16.mxu0 0
        %740 = vmatpush1.bf16.msra.mxu0 0
        %741 = vmatprep.subr.bf16.mxu0 0
        %742 = vmatpush1.bf16.msra.mxu0 0
        %743 = vmatprep.subr.bf16.mxu0 0
        %744 = vmatpush1.bf16.msra.mxu0 0
        %745 = vmatprep.subr.bf16.mxu0 0
        %746 = vmatpush1.bf16.msra.mxu0 0
        %747 = vmatprep.subr.bf16.mxu0 0
        %748 = vmatpush1.bf16.msra.mxu0 0
        %749 = vmatprep.subr.bf16.mxu0 0
        %750 = vmatpush1.bf16.msra.mxu0 0
        %751 = vmatprep.subr.bf16.mxu0 0
        %752 = vmatpush1.bf16.msra.mxu0 %v735
        %753 = vmatprep.subr.bf16.mxu0 0
        %754 = vmatpush2.bf16.msra.mxu0 0
        %755 = vmatprep.subr.bf16.mxu0 0
        %756 = vmatpush2.bf16.msra.mxu0 0
        %757 = vmatprep.subr.bf16.mxu0 0
        %758 = vmatpush2.bf16.msra.mxu0 0
        %759 = vmatprep.subr.bf16.mxu0 0
        %760 = vmatpush2.bf16.msra.mxu0 0
        %761 = vmatprep.subr.bf16.mxu0 0
        %762 = vmatpush2.bf16.msra.mxu0 0
        %763 = vmatprep.subr.bf16.mxu0 0
        %764 = vmatpush2.bf16.msra.mxu0 0
        %765 = vmatprep.subr.bf16.mxu0 0
        %766 = vmatpush2.bf16.msra.mxu0 0
        %767 = vmatprep.subr.bf16.mxu0 0
        %768 = vmatpush2.bf16.msra.mxu0 0
        %769 = vmatprep.mubr.bf16.mxu0 0
        %770 = vmatmul.mubr.bf16.gmra.mxu0 %v733
        %v771 = vpop.f32.mrf.mxu0
        %v772 = vadd.f32 0.0, %v771
        %v773 = vpop.f32.mrf.mxu0
        %v774 = vpop.f32.mrf.mxu0
        %v775 = vpop.f32.mrf.mxu0
        %776 = vdwg.mxu0
        %v777 = vadd.f32 %v588, %v637
        %v778 = vadd.f32 %v589, %v682
        %v779 = vadd.f32 %v590, %v727
        %v780 = vadd.f32 %v591, %v772
        %781 = vst.msk [vmem:[#allocation4] sm:$0xff] %vm286, %v777
        %782 = vst.msk [vmem:[#allocation4 + $0x8] sm:$0xff] %vm286, %v778
        %783 = vst.msk [vmem:[#allocation4 + $0x10] sm:$0xff] %vm286, %v779
        %784 = vst.msk [vmem:[#allocation4 + $0x18] sm:$0xff] %vm286, %v780
        %785 = vst.msk [vmem:[#allocation2] sm:$0xff] %vm559, %v487
        %786 = vst.msk [vmem:[#allocation2 + $0x8] sm:$0xff] %vm559, %v488
        %787 = vst.msk [vmem:[#allocation2 + $0x10] sm:$0xff] %vm559, %v489
        %788 = vst.msk [vmem:[#allocation2 + $0x18] sm:$0xff] %vm559, %v490
        // Predicated region
        $region41: #{multi_head_attention.3} parent=35 // pred_check
          %p789 = pneg %p260
        $region42: #{multi_head_attention.3} parent=35 // pred_check_branch
          %791 = sbr.rel (%p789) target = $region44
        $region43: #{multi_head_attention.3} parent=35 // pred_region
          %v792 = vld [vmem:[#allocation3] sm:$0xff]
          %v793 = vld [vmem:[#allocation3 + $0x8] sm:$0xff]
          %v794 = vld [vmem:[#allocation3 + $0x10] sm:$0xff]
          %v795 = vld [vmem:[#allocation3 + $0x18] sm:$0xff]
          %v796 = vrcp.pop %v792
          %v797 = vrcp.pop %v793
          %v798 = vrcp.pop %v794
          %v799 = vrcp.pop %v795
          %v800 = vld [vmem:[#allocation4] sm:$0xff]
          %v801 = vld [vmem:[#allocation4 + $0x8] sm:$0xff]
          %v802 = vld [vmem:[#allocation4 + $0x10] sm:$0xff]
          %v803 = vld [vmem:[#allocation4 + $0x18] sm:$0xff]
          %805 = vset.pattern.permute.xlu0 0
          %806 = vperm.xlu0 %805, %v796
          %v807 = vpop.permute.xlu0 %806
          %810 = vset.pattern.permute.xlu0 0
          %811 = vperm.xlu0 %810, %v797
          %v812 = vpop.permute.xlu0 %811
          %815 = vset.pattern.permute.xlu0 0
          %816 = vperm.xlu0 %815, %v798
          %v817 = vpop.permute.xlu0 %816
          %820 = vset.pattern.permute.xlu0 0
          %821 = vperm.xlu0 %820, %v799
          %v822 = vpop.permute.xlu0 %821
          %v824 = vmul.f32 %v800, %v807
          %v825 = vmul.f32 %v801, %v812
          %v826 = vmul.f32 %v802, %v817
          %v827 = vmul.f32 %v803, %v822
          %v828 = vpack.c.bf16 %v824, %v824
          %v829 = vpack.c.bf16 %v825, %v825
          %v830 = vpack.c.bf16 %v826, %v826
          %v831 = vpack.c.bf16 %v827, %v827
          %v832 = vld [vmem:[%s2] sm:$0xf]
          %s833 = scalar_lea.vmem %s2, 4
          %v834 = vld [vmem:[%s833] sm:$0xf]
          %v836 = vsel %vm286, %v829, 0
          %v839 = vsel %vm599, %v834, 0
          %841 = vmatprep.subr.bf16.mxu0 0
          %842 = vmatpush1.bf16.msra.mxu0 0
          %843 = vmatprep.subr.bf16.mxu0 0
          %844 = vmatpush1.bf16.msra.mxu0 0
          %845 = vmatprep.subr.bf16.mxu0 0
          %846 = vmatpush1.bf16.msra.mxu0 0
          %847 = vmatprep.subr.bf16.mxu0 0
          %848 = vmatpush1.bf16.msra.mxu0 0
          %849 = vmatprep.subr.bf16.mxu0 0
          %850 = vmatpush1.bf16.msra.mxu0 0
          %851 = vmatprep.subr.bf16.mxu0 0
          %852 = vmatpush1.bf16.msra.mxu0 0
          %853 = vmatprep.subr.bf16.mxu0 0
          %854 = vmatpush1.bf16.msra.mxu0 0
          %855 = vmatprep.subr.bf16.mxu0 0
          %856 = vmatpush1.bf16.msra.mxu0 %v839
          %857 = vmatprep.subr.bf16.mxu0 0
          %858 = vmatpush2.bf16.msra.mxu0 0
          %859 = vmatprep.subr.bf16.mxu0 0
          %860 = vmatpush2.bf16.msra.mxu0 0
          %861 = vmatprep.subr.bf16.mxu0 0
          %862 = vmatpush2.bf16.msra.mxu0 0
          %863 = vmatprep.subr.bf16.mxu0 0
          %864 = vmatpush2.bf16.msra.mxu0 0
          %865 = vmatprep.subr.bf16.mxu0 0
          %866 = vmatpush2.bf16.msra.mxu0 0
          %867 = vmatprep.subr.bf16.mxu0 0
          %868 = vmatpush2.bf16.msra.mxu0 0
          %869 = vmatprep.subr.bf16.mxu0 0
          %870 = vmatpush2.bf16.msra.mxu0 0
          %871 = vmatprep.subr.bf16.mxu0 0
          %872 = vmatpush2.bf16.msra.mxu0 0
          %873 = vmatprep.mubr.bf16.mxu0 0
          %874 = vmatmul.mubr.bf16.gmra.mxu0 %v836
          %v875 = vpop.f32.mrf.mxu0
          %v876 = vadd.f32 0.0, %v875
          %v877 = vpop.f32.mrf.mxu0
          %v878 = vpop.f32.mrf.mxu0
          %v879 = vpop.f32.mrf.mxu0
          %880 = vdwg.mxu0
          %v882 = vsel %vm286, %v828, 0
          %v885 = vsel %vm599, %v832, 0
          %887 = vmatprep.subr.bf16.mxu0 0
          %888 = vmatpush1.bf16.msra.mxu0 0
          %889 = vmatprep.subr.bf16.mxu0 0
          %890 = vmatpush1.bf16.msra.mxu0 0
          %891 = vmatprep.subr.bf16.mxu0 0
          %892 = vmatpush1.bf16.msra.mxu0 0
          %893 = vmatprep.subr.bf16.mxu0 0
          %894 = vmatpush1.bf16.msra.mxu0 0
          %895 = vmatprep.subr.bf16.mxu0 0
          %896 = vmatpush1.bf16.msra.mxu0 0
          %897 = vmatprep.subr.bf16.mxu0 0
          %898 = vmatpush1.bf16.msra.mxu0 0
          %899 = vmatprep.subr.bf16.mxu0 0
          %900 = vmatpush1.bf16.msra.mxu0 0
          %901 = vmatprep.subr.bf16.mxu0 0
          %902 = vmatpush1.bf16.msra.mxu0 %v885
          %903 = vmatprep.subr.bf16.mxu0 0
          %904 = vmatpush2.bf16.msra.mxu0 0
          %905 = vmatprep.subr.bf16.mxu0 0
          %906 = vmatpush2.bf16.msra.mxu0 0
          %907 = vmatprep.subr.bf16.mxu0 0
          %908 = vmatpush2.bf16.msra.mxu0 0
          %909 = vmatprep.subr.bf16.mxu0 0
          %910 = vmatpush2.bf16.msra.mxu0 0
          %911 = vmatprep.subr.bf16.mxu0 0
          %912 = vmatpush2.bf16.msra.mxu0 0
          %913 = vmatprep.subr.bf16.mxu0 0
          %914 = vmatpush2.bf16.msra.mxu0 0
          %915 = vmatprep.subr.bf16.mxu0 0
          %916 = vmatpush2.bf16.msra.mxu0 0
          %917 = vmatprep.subr.bf16.mxu0 0
          %918 = vmatpush2.bf16.msra.mxu0 0
          %919 = vmatprep.mubr.bf16.mxu0 0
          %920 = vmatmul.mubr.bf16.gmra.mxu0 %v882
          %v921 = vpop.f32.mrf.mxu0
          %v922 = vadd.f32 %v876, %v921
          %v923 = vpop.f32.mrf.mxu0
          %v924 = vpop.f32.mrf.mxu0
          %v925 = vpop.f32.mrf.mxu0
          %926 = vdwg.mxu0
          %s927 = scalar_lea.vmem %s2, 8
          %v928 = vld [vmem:[%s927] sm:$0xf]
          %v930 = vsel %vm286, %v830, 0
          %v933 = vsel %vm599, %v928, 0
          %935 = vmatprep.subr.bf16.mxu0 0
          %936 = vmatpush1.bf16.msra.mxu0 0
          %937 = vmatprep.subr.bf16.mxu0 0
          %938 = vmatpush1.bf16.msra.mxu0 0
          %939 = vmatprep.subr.bf16.mxu0 0
          %940 = vmatpush1.bf16.msra.mxu0 0
          %941 = vmatprep.subr.bf16.mxu0 0
          %942 = vmatpush1.bf16.msra.mxu0 0
          %943 = vmatprep.subr.bf16.mxu0 0
          %944 = vmatpush1.bf16.msra.mxu0 0
          %945 = vmatprep.subr.bf16.mxu0 0
          %946 = vmatpush1.bf16.msra.mxu0 0
          %947 = vmatprep.subr.bf16.mxu0 0
          %948 = vmatpush1.bf16.msra.mxu0 0
          %949 = vmatprep.subr.bf16.mxu0 0
          %950 = vmatpush1.bf16.msra.mxu0 %v933
          %951 = vmatprep.subr.bf16.mxu0 0
          %952 = vmatpush2.bf16.msra.mxu0 0
          %953 = vmatprep.subr.bf16.mxu0 0
          %954 = vmatpush2.bf16.msra.mxu0 0
          %955 = vmatprep.subr.bf16.mxu0 0
          %956 = vmatpush2.bf16.msra.mxu0 0
          %957 = vmatprep.subr.bf16.mxu0 0
          %958 = vmatpush2.bf16.msra.mxu0 0
          %959 = vmatprep.subr.bf16.mxu0 0
          %960 = vmatpush2.bf16.msra.mxu0 0
          %961 = vmatprep.subr.bf16.mxu0 0
          %962 = vmatpush2.bf16.msra.mxu0 0
          %963 = vmatprep.subr.bf16.mxu0 0
          %964 = vmatpush2.bf16.msra.mxu0 0
          %965 = vmatprep.subr.bf16.mxu0 0
          %966 = vmatpush2.bf16.msra.mxu0 0
          %967 = vmatprep.mubr.bf16.mxu0 0
          %968 = vmatmul.mubr.bf16.gmra.mxu0 %v930
          %v969 = vpop.f32.mrf.mxu0
          %v970 = vadd.f32 0.0, %v969
          %v971 = vpop.f32.mrf.mxu0
          %v972 = vpop.f32.mrf.mxu0
          %v973 = vpop.f32.mrf.mxu0
          %974 = vdwg.mxu0
          %v975 = vadd.f32 %v922, %v970
          %s976 = scalar_lea.vmem %s2, 12
          %v977 = vld [vmem:[%s976] sm:$0xf]
          %v979 = vsel %vm286, %v831, 0
          %v982 = vsel %vm599, %v977, 0
          %984 = vmatprep.subr.bf16.mxu0 0
          %985 = vmatpush1.bf16.msra.mxu0 0
          %986 = vmatprep.subr.bf16.mxu0 0
          %987 = vmatpush1.bf16.msra.mxu0 0
          %988 = vmatprep.subr.bf16.mxu0 0
          %989 = vmatpush1.bf16.msra.mxu0 0
          %990 = vmatprep.subr.bf16.mxu0 0
          %991 = vmatpush1.bf16.msra.mxu0 0
          %992 = vmatprep.subr.bf16.mxu0 0
          %993 = vmatpush1.bf16.msra.mxu0 0
          %994 = vmatprep.subr.bf16.mxu0 0
          %995 = vmatpush1.bf16.msra.mxu0 0
          %996 = vmatprep.subr.bf16.mxu0 0
          %997 = vmatpush1.bf16.msra.mxu0 0
          %998 = vmatprep.subr.bf16.mxu0 0
          %999 = vmatpush1.bf16.msra.mxu0 %v982
          %1000 = vmatprep.subr.bf16.mxu0 0
          %1001 = vmatpush2.bf16.msra.mxu0 0
          %1002 = vmatprep.subr.bf16.mxu0 0
          %1003 = vmatpush2.bf16.msra.mxu0 0
          %1004 = vmatprep.subr.bf16.mxu0 0
          %1005 = vmatpush2.bf16.msra.mxu0 0
          %1006 = vmatprep.subr.bf16.mxu0 0
          %1007 = vmatpush2.bf16.msra.mxu0 0
          %1008 = vmatprep.subr.bf16.mxu0 0
          %1009 = vmatpush2.bf16.msra.mxu0 0
          %1010 = vmatprep.subr.bf16.mxu0 0
          %1011 = vmatpush2.bf16.msra.mxu0 0
          %1012 = vmatprep.subr.bf16.mxu0 0
          %1013 = vmatpush2.bf16.msra.mxu0 0
          %1014 = vmatprep.subr.bf16.mxu0 0
          %1015 = vmatpush2.bf16.msra.mxu0 0
          %1016 = vmatprep.mubr.bf16.mxu0 0
          %1017 = vmatmul.mubr.bf16.gmra.mxu0 %v979
          %v1018 = vpop.f32.mrf.mxu0
          %v1019 = vadd.f32 0.0, %v1018
          %v1020 = vpop.f32.mrf.mxu0
          %v1021 = vpop.f32.mrf.mxu0
          %v1022 = vpop.f32.mrf.mxu0
          %1023 = vdwg.mxu0
          %v1024 = vadd.f32 %v975, %v1019
          %v1025 = vld [vmem:[%s3] sm:$0x1]
          %v1027 = vlaneseq
          %v1028 = vshrl.u32 %v1027, 7
          %v1029 = vsub.s32 0, %v1028
          %v1030 = vrot.slane %v1025, %v1029
          %v1032 = vadd.f32 %v1024, %v1030
          %vm1033 = vcmask 261120
          %1034 = vst.msk [vmem:[%s242] sm:$0xff] %vm1033, %v1032
        $region44: #{multi_head_attention.3} parent=35 // pred_fallthru
          _
        %s1035 = sand.u32 %s145, 1
        %s1036 = scalar_lea.sflag [#allocation6], %s1035
        %s1037 = sand.u32 %s145, 1
        %s1038 = smul.addr %s1037, 8
        %s1039 = scalar_lea.vmem [#allocation5], %s1038
        // Predicated region
        $region45: #{multi_head_attention.3} parent=35 // pred_check
          %p1040 = pneg %p155
        $region46: #{multi_head_attention.3} parent=35 // pred_check_branch
          %1042 = sbr.rel (%p1040) target = $region48
        $region47: #{multi_head_attention.3} parent=35 // pred_region
          %s1044 = ssub.s32 128, 128
          %1045 = vsyncadd %s1036, %s1044
          %s1046 = sadd.s32 %s24, %s23
          %s1047 = smul.addr %s1046, 128
          %s1048 = scalar_lea.hbm %s4, %s1047
          %s1050 = sshll.u32 %s1039, 4
          %s1051 = int_to_ptr.vmem [resolvable:$true] %s1050
          %1053 = dma.vmem_to_hbm [thread:$0]  %s1051, 128, %s1048, %s1036
        $region48: #{multi_head_attention.3} parent=35 // pred_fallthru
          _
      $region36: #{multi_head_attention.3} parent=5 // pred_fallthru
        _
      %p1054 = scmp.le.s32.totalorder 2, %s13
      // Predicated region
      $region49: #{multi_head_attention.3} parent=5 // pred_check
        %p1055 = pneg %p1054
      $region50: #{multi_head_attention.3} parent=5 // pred_check_branch
        %1057 = sbr.rel (%p1055) target = $region52
      $region51: #{multi_head_attention.3} parent=5 // pred_region
        %s1058 = ssub.s32 %s13, 2
        // Predicated region
        $region53: #{multi_head_attention.3} parent=51 // pred_check
          %p1059 = pneg %p161
        $region54: #{multi_head_attention.3} parent=51 // pred_check_branch
          %1061 = sbr.rel (%p1059) target = $region56
        $region55: #{multi_head_attention.3} parent=51 // pred_region
          %s1062 = sand.u32 %s146, 1
          %s1063 = scalar_lea.sflag [#allocation6], %s1062
          %s1064 = sand.u32 %s146, 1
          %s1065 = smul.addr %s1064, 8
          %s1066 = scalar_lea.vmem [#allocation5], %s1065
          %1067 = dma.done %s1063, 128
        $region56: #{multi_head_attention.3} parent=51 // pred_fallthru
          _
      $region52: #{multi_head_attention.3} parent=5 // pred_fallthru
        _
    $region6: #{multi_head_attention.3} parent=1 // loop_footer
      %s17 = sadd.s32 1, %s13
    $region7: #{multi_head_attention.3} parent=1 // loop_footer_branch
      %12 = sbr.rel target = $region3
    $region8: #{multi_head_attention.3} parent=1 // loop_exit
      _
    %1068 = vsyncpa [#allocation6], 1
    %s1069 = scalar_lea.sflag [#allocation6], 1
    %1070 = vsyncpa %s1069, 1

</llo_original>
